<compile_context>
chip_gen: v5e
topology: v5e:2x2
jax: 0.10.0
libtpu: 0.0.40
codegen_flags: <defaults>
</compile_context>

<pallas_src>
import math

import jax
import jax.numpy as jnp
from jax import lax
from jax.experimental import pallas as pl
from jax.experimental.pallas import tpu as pltpu  # noqa: F401  (kept for parity)

# ----- small, self-consistent config (GPT-2 scaled down) -----
B = 2            # batch
T = 8            # sequence length
C = 32           # n_embd
NH = 2           # n_head
HD = C // NH     # head dim
NL = 2           # n_layer
VOCAB = 64       # vocab_size
BLOCK_SIZE = 16  # positional table size (block_size)
NUM_CLASSES = 3
LN_EPS = 1e-5
BT = B * T
OUT_PAD = 128    # lane-dense fused (lm | sentiment | zero-pad) head width
NEG_BIG = -1e30  # large finite negative (safer than -inf for masked entries)


# ---------------------------------------------------------------------------
# GELU: PyTorch nn.GELU() default is the exact erf form.  Prefer it; fall back
# to the tanh approximation only if this Mosaic build cannot lower erf.
# ---------------------------------------------------------------------------
def _gelu_exact(x):
    return jax.nn.gelu(x, approximate=False)


def _gelu_tanh(x):
    return jax.nn.gelu(x, approximate=True)


def _pick_gelu():
    def k(x_ref, o_ref):
        o_ref[...] = _gelu_exact(x_ref[...])

    try:
        x = jnp.zeros((8, 128), jnp.float32)
        jax.jit(
            pl.pallas_call(k, out_shape=jax.ShapeDtypeStruct((8, 128), jnp.float32))
        ).lower(x).compile()
        return _gelu_exact
    except Exception:
        # TODO(synk): exact erf-GELU not lowerable by this Mosaic build; tanh
        # approximation diverges slightly from nn.GELU() numerics.
        return _gelu_tanh


GELU = _pick_gelu()


def _layernorm(x, w, b):
    # Single-pass moments: E[x] and E[x^2] reduce the same operand, so the two
    # cross-lane reductions are independent (no mu -> (x-mu)^2 serial chain).
    mu = jnp.mean(x, axis=-1, keepdims=True)
    m2 = jnp.mean(x * x, axis=-1, keepdims=True)
    var = m2 - mu * mu
    return (x - mu) * lax.rsqrt(var + LN_EPS) * w + b


# ---------------------------------------------------------------------------
# Single fused kernel: embeddings -> NL blocks -> final LN -> fused heads.
# Everything (weights + activations) is VMEM-resident; no grid, no scratch.
# ---------------------------------------------------------------------------
def gpt_fused_kernel(idx_ref, wte_ref, wpe_bt_ref,
                     ln1w_ref, ln1b_ref, wqkv_ref, bqkv_ref, wproj_ref, bproj_ref,
                     ln2w_ref, ln2b_ref, wfc_ref, bfc_ref, wfc2_ref, bfc2_ref,
                     lnfw_ref, lnfb_ref, headw_ref, headb_ref,
                     out_ref):
    # --- token embedding as a one-hot MXU matmul + pre-tiled positional add ---
    idx = idx_ref[...]                                            # (BT, 1) int32
    vocab_ids = lax.broadcasted_iota(jnp.int32, (BT, VOCAB), 1)
    onehot = (vocab_ids == idx).astype(jnp.float32)               # (BT, VOCAB)
    x = jnp.dot(onehot, wte_ref[...], preferred_element_type=jnp.float32)
    x = x + wpe_bt_ref[...]                                       # (BT, C)

    # causal mask, shared across layers/heads
    row = lax.broadcasted_iota(jnp.int32, (B, T, T), 1)
    col = lax.broadcasted_iota(jnp.int32, (B, T, T), 2)
    causal = row >= col                                           # (B, T, T)

    for l in range(NL):
        # --- causal self-attention ---
        h = _layernorm(x, ln1w_ref[l], ln1b_ref[l])               # (BT, C)
        qkv = jnp.dot(h, wqkv_ref[l],
                      preferred_element_type=jnp.float32) + bqkv_ref[l]  # (BT, 3C)

        head_outs = []
        for hh in range(NH):
            # 1/sqrt(HD) scale is pre-folded into the Q columns of wqkv/bqkv.
            q = qkv[:, hh * HD:(hh + 1) * HD].reshape(B, T, HD)
            k = qkv[:, C + hh * HD:C + (hh + 1) * HD].reshape(B, T, HD)
            v = qkv[:, 2 * C + hh * HD:2 * C + (hh + 1) * HD].reshape(B, T, HD)

            att = jnp.einsum('bqd,bkd->bqk', q, k,
                             preferred_element_type=jnp.float32)  # (B, T, T)
            att = jnp.where(causal, att, NEG_BIG)
            att = att - jnp.max(att, axis=-1, keepdims=True)
            p = jnp.exp(att)
            inv = pl.reciprocal(jnp.sum(p, axis=-1, keepdims=True), approx=True)
            p = p * inv
            yh = jnp.einsum('bqk,bkd->bqd', p, v,
                            preferred_element_type=jnp.float32)   # (B, T, HD)
            head_outs.append(yh.reshape(BT, HD))

        # register-level concat of head outputs -> feed c_proj directly
        y = jnp.concatenate(head_outs, axis=-1)                   # (BT, C)
        x = x + jnp.dot(y, wproj_ref[l],
                        preferred_element_type=jnp.float32) + bproj_ref[l]

        # --- MLP ---
        h = _layernorm(x, ln2w_ref[l], ln2b_ref[l])
        h = jnp.dot(h, wfc_ref[l], preferred_element_type=jnp.float32) + bfc_ref[l]
        h = GELU(h)
        h = jnp.dot(h, wfc2_ref[l], preferred_element_type=jnp.float32) + bfc2_ref[l]
        x = x + h

    # --- final LayerNorm (last position only) + fused lane-dense heads ---
    x_last = x.reshape(B, T, C)[:, T - 1, :]                      # (B, C)
    hf = _layernorm(x_last, lnfw_ref[...], lnfb_ref[...])
    # headw = [ wte^T (tied lm_head) | sentiment W | zero pad ]  -> one 128-lane
    # unmasked store; the wrapper slices lm / sentiment logits back out.
    out_ref[...] = jnp.dot(hf, headw_ref[...],
                           preferred_element_type=jnp.float32) + headb_ref[...]


# ---------------------------------------------------------------------------
# Deterministic parameter init (mirrors GPT._init_weights):
#   Linear / Embedding weights ~ N(0, 0.02), biases = 0,
#   LayerNorm weight = 1 / bias = 0,
#   c_proj.weight ~ N(0, 0.02 / sqrt(2*n_layer)).
# ---------------------------------------------------------------------------
def init_params(key):
    keys = iter(jax.random.split(key, 64))

    def nrm(shape, s=0.02):
        return (s * jax.random.normal(next(keys), shape)).astype(jnp.float32)

    proj_std = 0.02 / math.sqrt(2 * NL)
    params = {
        'wte': nrm((VOCAB, C)),             # tied with lm_head
        'wpe': nrm((BLOCK_SIZE, C)),
        'lnfw': jnp.ones((1, C), jnp.float32),
        'lnfb': jnp.zeros((1, C), jnp.float32),
        'sw': nrm((C, NUM_CLASSES)),
        'sb': jnp.zeros((1, NUM_CLASSES), jnp.float32),
        'blocks': [],
    }
    for _ in range(NL):
        params['blocks'].append(dict(
            ln1w=jnp.ones((1, C), jnp.float32),
            ln1b=jnp.zeros((1, C), jnp.float32),
            wqkv=nrm((C, 3 * C)),
            bqkv=jnp.zeros((1, 3 * C), jnp.float32),
            wproj=nrm((C, C), proj_std),
            bproj=jnp.zeros((1, C), jnp.float32),
            ln2w=jnp.ones((1, C), jnp.float32),
            ln2b=jnp.zeros((1, C), jnp.float32),
            wfc=nrm((C, 4 * C)),
            bfc=jnp.zeros((1, 4 * C), jnp.float32),
            wfc2=nrm((4 * C, C), proj_std),
            bfc2=jnp.zeros((1, C), jnp.float32),
        ))
    return params


def pack_params(p):
    """One-time packing: stack per-layer weights into (NL, ...) slabs, fold
    1/sqrt(HD) into the Q columns of c_attn, pre-tile wpe to (BT, C), and
    build a fused, pre-transposed, lane-dense [lm | sentiment] head."""
    def stack(name):
        return jnp.stack([blk[name] for blk in p['blocks']], axis=0)

    qscale = jnp.concatenate([
        jnp.full((C,), 1.0 / math.sqrt(HD), jnp.float32),
        jnp.ones((2 * C,), jnp.float32)])

    headw = jnp.zeros((C, OUT_PAD), jnp.float32)
    headw = headw.at[:, :VOCAB].set(p['wte'].T)                   # tied lm_head
    headw = headw.at[:, VOCAB:VOCAB + NUM_CLASSES].set(p['sw'])   # sentiment
    headb = jnp.zeros((1, OUT_PAD), jnp.float32)
    headb = headb.at[:, VOCAB:VOCAB + NUM_CLASSES].set(p['sb'])   # lm_head has no bias

    return dict(
        wte=p['wte'],
        wpe_bt=jnp.tile(p['wpe'][:T], (B, 1)),                    # (BT, C)
        lnfw=p['lnfw'], lnfb=p['lnfb'],
        headw=headw, headb=headb,
        ln1w=stack('ln1w'), ln1b=stack('ln1b'),
        wqkv=stack('wqkv') * qscale[None, None, :],
        bqkv=stack('bqkv') * qscale[None, None, :],
        wproj=stack('wproj'), bproj=stack('bproj'),
        ln2w=stack('ln2w'), ln2b=stack('ln2b'),
        wfc=stack('wfc'), bfc=stack('bfc'),
        wfc2=stack('wfc2'), bfc2=stack('bfc2'),
    )


@jax.jit
def gpt_forward(idx, packed):
    idx2 = idx.reshape(BT, 1).astype(jnp.int32)
    out = pl.pallas_call(
        gpt_fused_kernel,
        out_shape=jax.ShapeDtypeStruct((B, OUT_PAD), jnp.float32),
    )(idx2, packed['wte'], packed['wpe_bt'],
      packed['ln1w'], packed['ln1b'], packed['wqkv'], packed['bqkv'],
      packed['wproj'], packed['bproj'],
      packed['ln2w'], packed['ln2b'], packed['wfc'], packed['bfc'],
      packed['wfc2'], packed['bfc2'],
      packed['lnfw'], packed['lnfb'], packed['headw'], packed['headb'])
    sent = out[:, VOCAB:VOCAB + NUM_CLASSES]                      # (B, NUM_CLASSES)
    lm = out[:, :VOCAB].reshape(B, 1, VOCAB)                      # lm_head(x[:, [-1], :])
    return sent, lm


def gpt_module_forward(idx, packed, targets=None, labels=None):
    """Mirrors GPT.forward's (sentiment_logits, lm_loss, sentiment_loss)
    return for the inference path (targets=None, labels=None)."""
    sentiment_logits, _lm_logits = gpt_forward(idx, packed)
    return sentiment_logits, None, None


# ---------------------------------------------------------------------------
# Pure-JAX reference (same math, unfused) for a correctness check.
# ---------------------------------------------------------------------------
def gpt_forward_ref(idx, p):
    def ln(x, w, b):
        mu = x.mean(-1, keepdims=True)
        var = ((x - mu) ** 2).mean(-1, keepdims=True)
        return (x - mu) / jnp.sqrt(var + LN_EPS) * w.reshape(-1) + b.reshape(-1)

    x = p['wte'][idx] + p['wpe'][:T][None, :, :]                  # (B, T, C)
    causal = jnp.tril(jnp.ones((T, T), bool))
    for blk in p['blocks']:
        h = ln(x, blk['ln1w'], blk['ln1b'])
        qkv = h @ blk['wqkv'] + blk['bqkv'].reshape(-1)
        q, k, v = jnp.split(qkv, 3, axis=-1)
        q = q.reshape(B, T, NH, HD).transpose(0, 2, 1, 3)
        k = k.reshape(B, T, NH, HD).transpose(0, 2, 1, 3)
        v = v.reshape(B, T, NH, HD).transpose(0, 2, 1, 3)
        att = (q @ jnp.swapaxes(k, -1, -2)) / math.sqrt(HD)
        att = jnp.where(causal[None, None], att, -jnp.inf)
        att = jax.nn.softmax(att, axis=-1)
        y = (att @ v).transpose(0, 2, 1, 3).reshape(B, T, C)
        x = x + y @ blk['wproj'] + blk['bproj'].reshape(-1)
        h = ln(x, blk['ln2w'], blk['ln2b'])
        h = h @ blk['wfc'] + blk['bfc'].reshape(-1)
        h = GELU(h)
        h = h @ blk['wfc2'] + blk['bfc2'].reshape(-1)
        x = x + h
    xl = ln(x[:, -1, :], p['lnfw'], p['lnfb'])
    lm = xl @ p['wte'].T
    sent = xl @ p['sw'] + p['sb'].reshape(-1)
    return sent, lm.reshape(B, 1, VOCAB)


if __name__ == "__main__":
    key = jax.random.PRNGKey(0)
    pkey, dkey = jax.random.split(key)
    params = init_params(pkey)
    packed = pack_params(params)
    idx = jax.random.randint(dkey, (B, T), 0, VOCAB, dtype=jnp.int32)

    sent_logits, lm_logits = gpt_forward(idx, packed)
    jax.block_until_ready((sent_logits, lm_logits))

    assert sent_logits.shape == (B, NUM_CLASSES)
    assert lm_logits.shape == (B, 1, VOCAB)
    assert sent_logits.dtype == jnp.float32
    assert bool(jnp.all(jnp.isfinite(sent_logits)))
    assert bool(jnp.all(jnp.isfinite(lm_logits)))

    # correctness vs. pure-JAX reference (loose tol: approx reciprocal + fused LN moments)
    sent_ref, lm_ref = gpt_forward_ref(idx, params)
    assert bool(jnp.allclose(sent_logits, sent_ref, atol=3e-3, rtol=3e-3))
    assert bool(jnp.allclose(lm_logits, lm_ref, atol=3e-3, rtol=3e-3))

    sentiment_logits, lm_loss, sentiment_loss = gpt_module_forward(idx, packed)
    jax.block_until_ready(sentiment_logits)
    assert lm_loss is None and sentiment_loss is None

    print("KERNEL_OK")
</pallas_src>

<mosaic_0001>
module attributes {stable_mosaic.version = 11 : i64} {
  func.func @gpt_fused_kernel(%arg0: memref<16x1xi32, #tpu.memory_space<vmem>>, %arg1: memref<64x32xf32, #tpu.memory_space<vmem>>, %arg2: memref<16x32xf32, #tpu.memory_space<vmem>>, %arg3: memref<2x1x32xf32, #tpu.memory_space<vmem>>, %arg4: memref<2x1x32xf32, #tpu.memory_space<vmem>>, %arg5: memref<2x32x96xf32, #tpu.memory_space<vmem>>, %arg6: memref<2x1x96xf32, #tpu.memory_space<vmem>>, %arg7: memref<2x32x32xf32, #tpu.memory_space<vmem>>, %arg8: memref<2x1x32xf32, #tpu.memory_space<vmem>>, %arg9: memref<2x1x32xf32, #tpu.memory_space<vmem>>, %arg10: memref<2x1x32xf32, #tpu.memory_space<vmem>>, %arg11: memref<2x32x128xf32, #tpu.memory_space<vmem>>, %arg12: memref<2x1x128xf32, #tpu.memory_space<vmem>>, %arg13: memref<2x128x32xf32, #tpu.memory_space<vmem>>, %arg14: memref<2x1x32xf32, #tpu.memory_space<vmem>>, %arg15: memref<1x32xf32, #tpu.memory_space<vmem>>, %arg16: memref<1x32xf32, #tpu.memory_space<vmem>>, %arg17: memref<32x128xf32, #tpu.memory_space<vmem>>, %arg18: memref<1x128xf32, #tpu.memory_space<vmem>>, %arg19: memref<2x128xf32, #tpu.memory_space<vmem>>) attributes {dimension_semantics = [], scalar_prefetch = 0 : i64, scratch_operands = 0 : i64, tpu.core_type = #tpu.core_type<tc>} {
    %c0 = arith.constant 0 : index
    %c0_0 = arith.constant 0 : index
    %0 = vector.load %arg0[%c0, %c0_0] : memref<16x1xi32, #tpu.memory_space<vmem>>, vector<16x1xi32>
    %1 = tpu.iota {dimensions = array<i32: 1>} : vector<16x64xi32>
    %2 = vector.broadcast %0 : vector<16x1xi32> to vector<16x64xi32>
    %3 = arith.cmpi eq, %1, %2 : vector<16x64xi32>
    %4 = arith.extui %3 : vector<16x64xi1> to vector<16x64xi32>
    %5 = arith.sitofp %4 : vector<16x64xi32> to vector<16x64xf32>
    %c0_1 = arith.constant 0 : index
    %c0_2 = arith.constant 0 : index
    %6 = vector.load %arg1[%c0_1, %c0_2] : memref<64x32xf32, #tpu.memory_space<vmem>>, vector<64x32xf32>
    %cst = arith.constant dense<0.000000e+00> : vector<16x32xf32>
    %7 = tpu.matmul %5, %6, %cst {dimension_numbers = #tpu.dot_dimension_numbers<[1], [0], [0], [1], [0, 0, 1, 1], [], []>} : vector<16x64xf32>, vector<64x32xf32>, vector<16x32xf32> -> vector<16x32xf32>
    %c0_3 = arith.constant 0 : index
    %c0_4 = arith.constant 0 : index
    %8 = vector.load %arg2[%c0_3, %c0_4] : memref<16x32xf32, #tpu.memory_space<vmem>>, vector<16x32xf32>
    %9 = arith.addf %7, %8 : vector<16x32xf32>
    %10 = tpu.iota {dimensions = array<i32: 1>} : vector<2x8x8xi32>
    %11 = tpu.iota {dimensions = array<i32: 2>} : vector<2x8x8xi32>
    %12 = arith.cmpi sge, %10, %11 : vector<2x8x8xi32>
    %c0_5 = arith.constant 0 : index
    %c0_6 = arith.constant 0 : index
    %c0_7 = arith.constant 0 : index
    %13 = vector.load %arg3[%c0_5, %c0_6, %c0_7] : memref<2x1x32xf32, #tpu.memory_space<vmem>>, vector<1x1x32xf32>
    %14 = vector.shape_cast %13 : vector<1x1x32xf32> to vector<1x32xf32>
    %c0_8 = arith.constant 0 : index
    %c0_9 = arith.constant 0 : index
    %c0_10 = arith.constant 0 : index
    %15 = vector.load %arg4[%c0_8, %c0_9, %c0_10] : memref<2x1x32xf32, #tpu.memory_space<vmem>>, vector<1x1x32xf32>
    %16 = vector.shape_cast %15 : vector<1x1x32xf32> to vector<1x32xf32>
    %cst_11 = arith.constant dense<0.000000e+00> : vector<16xf32>
    %17 = vector.multi_reduction <add>, %9, %cst_11 [1] : vector<16x32xf32> to vector<16xf32>
    %18 = vector.shape_cast %17 : vector<16xf32> to vector<16x1xf32>
    %cst_12 = arith.constant 3.200000e+01 : f32
    %19 = vector.broadcast %cst_12 : f32 to vector<16x1xf32>
    %20 = arith.divf %18, %19 : vector<16x1xf32>
    %21 = arith.mulf %9, %9 : vector<16x32xf32>
    %cst_13 = arith.constant dense<0.000000e+00> : vector<16xf32>
    %22 = vector.multi_reduction <add>, %21, %cst_13 [1] : vector<16x32xf32> to vector<16xf32>
    %23 = vector.shape_cast %22 : vector<16xf32> to vector<16x1xf32>
    %cst_14 = arith.constant 3.200000e+01 : f32
    %24 = vector.broadcast %cst_14 : f32 to vector<16x1xf32>
    %25 = arith.divf %23, %24 : vector<16x1xf32>
    %26 = arith.mulf %20, %20 : vector<16x1xf32>
    %27 = arith.subf %25, %26 : vector<16x1xf32>
    %28 = vector.broadcast %20 : vector<16x1xf32> to vector<16x32xf32>
    %29 = arith.subf %9, %28 : vector<16x32xf32>
    %cst_15 = arith.constant 9.99999974E-6 : f32
    %30 = vector.broadcast %cst_15 : f32 to vector<16x1xf32>
    %31 = arith.addf %27, %30 : vector<16x1xf32>
    %32 = math.rsqrt %31 : vector<16x1xf32>
    %33 = vector.broadcast %32 : vector<16x1xf32> to vector<16x32xf32>
    %34 = arith.mulf %29, %33 : vector<16x32xf32>
    %35 = vector.broadcast %14 : vector<1x32xf32> to vector<16x32xf32>
    %36 = arith.mulf %34, %35 : vector<16x32xf32>
    %37 = vector.broadcast %16 : vector<1x32xf32> to vector<16x32xf32>
    %38 = arith.addf %36, %37 : vector<16x32xf32>
    %c0_16 = arith.constant 0 : index
    %c0_17 = arith.constant 0 : index
    %c0_18 = arith.constant 0 : index
    %39 = vector.load %arg5[%c0_16, %c0_17, %c0_18] : memref<2x32x96xf32, #tpu.memory_space<vmem>>, vector<1x32x96xf32>
    %40 = vector.shape_cast %39 : vector<1x32x96xf32> to vector<32x96xf32>
    %cst_19 = arith.constant dense<0.000000e+00> : vector<16x96xf32>
    %41 = tpu.matmul %38, %40, %cst_19 {dimension_numbers = #tpu.dot_dimension_numbers<[1], [0], [0], [1], [0, 0, 1, 1], [], []>} : vector<16x32xf32>, vector<32x96xf32>, vector<16x96xf32> -> vector<16x96xf32>
    %c0_20 = arith.constant 0 : index
    %c0_21 = arith.constant 0 : index
    %c0_22 = arith.constant 0 : index
    %42 = vector.load %arg6[%c0_20, %c0_21, %c0_22] : memref<2x1x96xf32, #tpu.memory_space<vmem>>, vector<1x1x96xf32>
    %43 = vector.shape_cast %42 : vector<1x1x96xf32> to vector<1x96xf32>
    %44 = vector.broadcast %43 : vector<1x96xf32> to vector<16x96xf32>
    %45 = arith.addf %41, %44 : vector<16x96xf32>
    %46 = vector.extract_strided_slice %45 {offsets = [0, 0], sizes = [16, 16], strides = [1, 1]} : vector<16x96xf32> to vector<16x16xf32>
    %47 = vector.shape_cast %46 : vector<16x16xf32> to vector<2x8x16xf32>
    %48 = vector.extract_strided_slice %45 {offsets = [0, 32], sizes = [16, 16], strides = [1, 1]} : vector<16x96xf32> to vector<16x16xf32>
    %49 = vector.shape_cast %48 : vector<16x16xf32> to vector<2x8x16xf32>
    %50 = vector.extract_strided_slice %45 {offsets = [0, 64], sizes = [16, 16], strides = [1, 1]} : vector<16x96xf32> to vector<16x16xf32>
    %51 = vector.shape_cast %50 : vector<16x16xf32> to vector<2x8x16xf32>
    "tpu.trace_start"() <{level = 10 : i32, message = "bqd,bkd->bqk"}> : () -> ()
    %cst_23 = arith.constant dense<0.000000e+00> : vector<2x8x8xf32>
    %52 = tpu.matmul %47, %49, %cst_23 {dimension_numbers = #tpu.dot_dimension_numbers<[2], [2], [1], [1], [0, 0, 0, 1, 1, 1], [0], [0]>} : vector<2x8x16xf32>, vector<2x8x16xf32>, vector<2x8x8xf32> -> vector<2x8x8xf32>
    %cst_24 = arith.constant -1.000000e+30 : f32
    "tpu.trace_stop"() : () -> ()
    %53 = vector.broadcast %cst_24 : f32 to vector<2x8x8xf32>
    %54 = arith.select %12, %52, %53 : vector<2x8x8xi1>, vector<2x8x8xf32>
    %cst_25 = arith.constant dense<0xFF800000> : vector<2x8xf32>
    %55 = vector.multi_reduction <maximumf>, %54, %cst_25 [2] : vector<2x8x8xf32> to vector<2x8xf32>
    %56 = vector.shape_cast %55 : vector<2x8xf32> to vector<2x8x1xf32>
    %57 = vector.broadcast %56 : vector<2x8x1xf32> to vector<2x8x8xf32>
    %58 = arith.subf %54, %57 : vector<2x8x8xf32>
    %59 = math.exp %58 : vector<2x8x8xf32>
    %cst_26 = arith.constant dense<0.000000e+00> : vector<2x8xf32>
    %60 = vector.multi_reduction <add>, %59, %cst_26 [2] : vector<2x8x8xf32> to vector<2x8xf32>
    %61 = vector.shape_cast %60 : vector<2x8xf32> to vector<2x8x1xf32>
    %62 = tpu.reciprocal %61 {approx = true} : vector<2x8x1xf32> -> vector<2x8x1xf32>
    %63 = vector.broadcast %62 : vector<2x8x1xf32> to vector<2x8x8xf32>
    %64 = arith.mulf %59, %63 : vector<2x8x8xf32>
    "tpu.trace_start"() <{level = 10 : i32, message = "bqk,bkd->bqd"}> : () -> ()
    %cst_27 = arith.constant dense<0.000000e+00> : vector<2x8x16xf32>
    %65 = tpu.matmul %64, %51, %cst_27 {dimension_numbers = #tpu.dot_dimension_numbers<[2], [1], [1], [2], [0, 0, 0, 1, 1, 2], [0], [0]>} : vector<2x8x8xf32>, vector<2x8x16xf32>, vector<2x8x16xf32> -> vector<2x8x16xf32>
    "tpu.trace_stop"() : () -> ()
    %66 = vector.shape_cast %65 : vector<2x8x16xf32> to vector<16x16xf32>
    %67 = vector.extract_strided_slice %45 {offsets = [0, 16], sizes = [16, 16], strides = [1, 1]} : vector<16x96xf32> to vector<16x16xf32>
    %68 = vector.shape_cast %67 : vector<16x16xf32> to vector<2x8x16xf32>
    %69 = vector.extract_strided_slice %45 {offsets = [0, 48], sizes = [16, 16], strides = [1, 1]} : vector<16x96xf32> to vector<16x16xf32>
    %70 = vector.shape_cast %69 : vector<16x16xf32> to vector<2x8x16xf32>
    %71 = vector.extract_strided_slice %45 {offsets = [0, 80], sizes = [16, 16], strides = [1, 1]} : vector<16x96xf32> to vector<16x16xf32>
    %72 = vector.shape_cast %71 : vector<16x16xf32> to vector<2x8x16xf32>
    "tpu.trace_start"() <{level = 10 : i32, message = "bqd,bkd->bqk"}> : () -> ()
    %cst_28 = arith.constant dense<0.000000e+00> : vector<2x8x8xf32>
    %73 = tpu.matmul %68, %70, %cst_28 {dimension_numbers = #tpu.dot_dimension_numbers<[2], [2], [1], [1], [0, 0, 0, 1, 1, 1], [0], [0]>} : vector<2x8x16xf32>, vector<2x8x16xf32>, vector<2x8x8xf32> -> vector<2x8x8xf32>
    %cst_29 = arith.constant -1.000000e+30 : f32
    "tpu.trace_stop"() : () -> ()
    %74 = vector.broadcast %cst_29 : f32 to vector<2x8x8xf32>
    %75 = arith.select %12, %73, %74 : vector<2x8x8xi1>, vector<2x8x8xf32>
    %cst_30 = arith.constant dense<0xFF800000> : vector<2x8xf32>
    %76 = vector.multi_reduction <maximumf>, %75, %cst_30 [2] : vector<2x8x8xf32> to vector<2x8xf32>
    %77 = vector.shape_cast %76 : vector<2x8xf32> to vector<2x8x1xf32>
    %78 = vector.broadcast %77 : vector<2x8x1xf32> to vector<2x8x8xf32>
    %79 = arith.subf %75, %78 : vector<2x8x8xf32>
    %80 = math.exp %79 : vector<2x8x8xf32>
    %cst_31 = arith.constant dense<0.000000e+00> : vector<2x8xf32>
    %81 = vector.multi_reduction <add>, %80, %cst_31 [2] : vector<2x8x8xf32> to vector<2x8xf32>
    %82 = vector.shape_cast %81 : vector<2x8xf32> to vector<2x8x1xf32>
    %83 = tpu.reciprocal %82 {approx = true} : vector<2x8x1xf32> -> vector<2x8x1xf32>
    %84 = vector.broadcast %83 : vector<2x8x1xf32> to vector<2x8x8xf32>
    %85 = arith.mulf %80, %84 : vector<2x8x8xf32>
    "tpu.trace_start"() <{level = 10 : i32, message = "bqk,bkd->bqd"}> : () -> ()
    %cst_32 = arith.constant dense<0.000000e+00> : vector<2x8x16xf32>
    %86 = tpu.matmul %85, %72, %cst_32 {dimension_numbers = #tpu.dot_dimension_numbers<[2], [1], [1], [2], [0, 0, 0, 1, 1, 2], [0], [0]>} : vector<2x8x8xf32>, vector<2x8x16xf32>, vector<2x8x16xf32> -> vector<2x8x16xf32>
    "tpu.trace_stop"() : () -> ()
    %87 = vector.shape_cast %86 : vector<2x8x16xf32> to vector<16x16xf32>
    %88 = tpu.concatenate %66, %87 in 1 : vector<16x16xf32>, vector<16x16xf32> -> vector<16x32xf32>
    %c0_33 = arith.constant 0 : index
    %c0_34 = arith.constant 0 : index
    %c0_35 = arith.constant 0 : index
    %89 = vector.load %arg7[%c0_33, %c0_34, %c0_35] : memref<2x32x32xf32, #tpu.memory_space<vmem>>, vector<1x32x32xf32>
    %90 = vector.shape_cast %89 : vector<1x32x32xf32> to vector<32x32xf32>
    %cst_36 = arith.constant dense<0.000000e+00> : vector<16x32xf32>
    %91 = tpu.matmul %88, %90, %cst_36 {dimension_numbers = #tpu.dot_dimension_numbers<[1], [0], [0], [1], [0, 0, 1, 1], [], []>} : vector<16x32xf32>, vector<32x32xf32>, vector<16x32xf32> -> vector<16x32xf32>
    %92 = arith.addf %9, %91 : vector<16x32xf32>
    %c0_37 = arith.constant 0 : index
    %c0_38 = arith.constant 0 : index
    %c0_39 = arith.constant 0 : index
    %93 = vector.load %arg8[%c0_37, %c0_38, %c0_39] : memref<2x1x32xf32, #tpu.memory_space<vmem>>, vector<1x1x32xf32>
    %94 = vector.shape_cast %93 : vector<1x1x32xf32> to vector<1x32xf32>
    %95 = vector.broadcast %94 : vector<1x32xf32> to vector<16x32xf32>
    %96 = arith.addf %92, %95 : vector<16x32xf32>
    %c0_40 = arith.constant 0 : index
    %c0_41 = arith.constant 0 : index
    %c0_42 = arith.constant 0 : index
    %97 = vector.load %arg9[%c0_40, %c0_41, %c0_42] : memref<2x1x32xf32, #tpu.memory_space<vmem>>, vector<1x1x32xf32>
    %98 = vector.shape_cast %97 : vector<1x1x32xf32> to vector<1x32xf32>
    %c0_43 = arith.constant 0 : index
    %c0_44 = arith.constant 0 : index
    %c0_45 = arith.constant 0 : index
    %99 = vector.load %arg10[%c0_43, %c0_44, %c0_45] : memref<2x1x32xf32, #tpu.memory_space<vmem>>, vector<1x1x32xf32>
    %100 = vector.shape_cast %99 : vector<1x1x32xf32> to vector<1x32xf32>
    %cst_46 = arith.constant dense<0.000000e+00> : vector<16xf32>
    %101 = vector.multi_reduction <add>, %96, %cst_46 [1] : vector<16x32xf32> to vector<16xf32>
    %102 = vector.shape_cast %101 : vector<16xf32> to vector<16x1xf32>
    %cst_47 = arith.constant 3.200000e+01 : f32
    %103 = vector.broadcast %cst_47 : f32 to vector<16x1xf32>
    %104 = arith.divf %102, %103 : vector<16x1xf32>
    %105 = arith.mulf %96, %96 : vector<16x32xf32>
    %cst_48 = arith.constant dense<0.000000e+00> : vector<16xf32>
    %106 = vector.multi_reduction <add>, %105, %cst_48 [1] : vector<16x32xf32> to vector<16xf32>
    %107 = vector.shape_cast %106 : vector<16xf32> to vector<16x1xf32>
    %cst_49 = arith.constant 3.200000e+01 : f32
    %108 = vector.broadcast %cst_49 : f32 to vector<16x1xf32>
    %109 = arith.divf %107, %108 : vector<16x1xf32>
    %110 = arith.mulf %104, %104 : vector<16x1xf32>
    %111 = arith.subf %109, %110 : vector<16x1xf32>
    %112 = vector.broadcast %104 : vector<16x1xf32> to vector<16x32xf32>
    %113 = arith.subf %96, %112 : vector<16x32xf32>
    %cst_50 = arith.constant 9.99999974E-6 : f32
    %114 = vector.broadcast %cst_50 : f32 to vector<16x1xf32>
    %115 = arith.addf %111, %114 : vector<16x1xf32>
    %116 = math.rsqrt %115 : vector<16x1xf32>
    %117 = vector.broadcast %116 : vector<16x1xf32> to vector<16x32xf32>
    %118 = arith.mulf %113, %117 : vector<16x32xf32>
    %119 = vector.broadcast %98 : vector<1x32xf32> to vector<16x32xf32>
    %120 = arith.mulf %118, %119 : vector<16x32xf32>
    %121 = vector.broadcast %100 : vector<1x32xf32> to vector<16x32xf32>
    %122 = arith.addf %120, %121 : vector<16x32xf32>
    %c0_51 = arith.constant 0 : index
    %c0_52 = arith.constant 0 : index
    %c0_53 = arith.constant 0 : index
    %123 = vector.load %arg11[%c0_51, %c0_52, %c0_53] : memref<2x32x128xf32, #tpu.memory_space<vmem>>, vector<1x32x128xf32>
    %124 = vector.shape_cast %123 : vector<1x32x128xf32> to vector<32x128xf32>
    %cst_54 = arith.constant dense<0.000000e+00> : vector<16x128xf32>
    %125 = tpu.matmul %122, %124, %cst_54 {dimension_numbers = #tpu.dot_dimension_numbers<[1], [0], [0], [1], [0, 0, 1, 1], [], []>} : vector<16x32xf32>, vector<32x128xf32>, vector<16x128xf32> -> vector<16x128xf32>
    %c0_55 = arith.constant 0 : index
    %c0_56 = arith.constant 0 : index
    %c0_57 = arith.constant 0 : index
    %126 = vector.load %arg12[%c0_55, %c0_56, %c0_57] : memref<2x1x128xf32, #tpu.memory_space<vmem>>, vector<1x1x128xf32>
    %127 = vector.shape_cast %126 : vector<1x1x128xf32> to vector<1x128xf32>
    %128 = vector.broadcast %127 : vector<1x128xf32> to vector<16x128xf32>
    %129 = arith.addf %125, %128 : vector<16x128xf32>
    %130 = arith.mulf %129, %129 : vector<16x128xf32>
    %131 = arith.mulf %129, %130 : vector<16x128xf32>
    %cst_58 = arith.constant 4.471500e-02 : f32
    %132 = vector.broadcast %cst_58 : f32 to vector<16x128xf32>
    %133 = arith.mulf %132, %131 : vector<16x128xf32>
    %134 = arith.addf %129, %133 : vector<16x128xf32>
    %cst_59 = arith.constant 0.797884583 : f32
    %135 = vector.broadcast %cst_59 : f32 to vector<16x128xf32>
    %136 = arith.mulf %135, %134 : vector<16x128xf32>
    %137 = math.tanh %136 : vector<16x128xf32>
    %cst_60 = arith.constant 1.000000e+00 : f32
    %138 = vector.broadcast %cst_60 : f32 to vector<16x128xf32>
    %139 = arith.addf %138, %137 : vector<16x128xf32>
    %cst_61 = arith.constant 5.000000e-01 : f32
    %140 = vector.broadcast %cst_61 : f32 to vector<16x128xf32>
    %141 = arith.mulf %140, %139 : vector<16x128xf32>
    %142 = arith.mulf %129, %141 : vector<16x128xf32>
    %c0_62 = arith.constant 0 : index
    %c0_63 = arith.constant 0 : index
    %c0_64 = arith.constant 0 : index
    %143 = vector.load %arg13[%c0_62, %c0_63, %c0_64] : memref<2x128x32xf32, #tpu.memory_space<vmem>>, vector<1x128x32xf32>
    %144 = vector.shape_cast %143 : vector<1x128x32xf32> to vector<128x32xf32>
    %cst_65 = arith.constant dense<0.000000e+00> : vector<16x32xf32>
    %145 = tpu.matmul %142, %144, %cst_65 {dimension_numbers = #tpu.dot_dimension_numbers<[1], [0], [0], [1], [0, 0, 1, 1], [], []>} : vector<16x128xf32>, vector<128x32xf32>, vector<16x32xf32> -> vector<16x32xf32>
    %c0_66 = arith.constant 0 : index
    %c0_67 = arith.constant 0 : index
    %c0_68 = arith.constant 0 : index
    %146 = vector.load %arg14[%c0_66, %c0_67, %c0_68] : memref<2x1x32xf32, #tpu.memory_space<vmem>>, vector<1x1x32xf32>
    %147 = vector.shape_cast %146 : vector<1x1x32xf32> to vector<1x32xf32>
    %148 = vector.broadcast %147 : vector<1x32xf32> to vector<16x32xf32>
    %149 = arith.addf %145, %148 : vector<16x32xf32>
    %150 = arith.addf %96, %149 : vector<16x32xf32>
    %c1 = arith.constant 1 : index
    %c0_69 = arith.constant 0 : index
    %c0_70 = arith.constant 0 : index
    %151 = vector.load %arg3[%c1, %c0_69, %c0_70] : memref<2x1x32xf32, #tpu.memory_space<vmem>>, vector<1x1x32xf32>
    %152 = vector.shape_cast %151 : vector<1x1x32xf32> to vector<1x32xf32>
    %c1_71 = arith.constant 1 : index
    %c0_72 = arith.constant 0 : index
    %c0_73 = arith.constant 0 : index
    %153 = vector.load %arg4[%c1_71, %c0_72, %c0_73] : memref<2x1x32xf32, #tpu.memory_space<vmem>>, vector<1x1x32xf32>
    %154 = vector.shape_cast %153 : vector<1x1x32xf32> to vector<1x32xf32>
    %cst_74 = arith.constant dense<0.000000e+00> : vector<16xf32>
    %155 = vector.multi_reduction <add>, %150, %cst_74 [1] : vector<16x32xf32> to vector<16xf32>
    %156 = vector.shape_cast %155 : vector<16xf32> to vector<16x1xf32>
    %cst_75 = arith.constant 3.200000e+01 : f32
    %157 = vector.broadcast %cst_75 : f32 to vector<16x1xf32>
    %158 = arith.divf %156, %157 : vector<16x1xf32>
    %159 = arith.mulf %150, %150 : vector<16x32xf32>
    %cst_76 = arith.constant dense<0.000000e+00> : vector<16xf32>
    %160 = vector.multi_reduction <add>, %159, %cst_76 [1] : vector<16x32xf32> to vector<16xf32>
    %161 = vector.shape_cast %160 : vector<16xf32> to vector<16x1xf32>
    %cst_77 = arith.constant 3.200000e+01 : f32
    %162 = vector.broadcast %cst_77 : f32 to vector<16x1xf32>
    %163 = arith.divf %161, %162 : vector<16x1xf32>
    %164 = arith.mulf %158, %158 : vector<16x1xf32>
    %165 = arith.subf %163, %164 : vector<16x1xf32>
    %166 = vector.broadcast %158 : vector<16x1xf32> to vector<16x32xf32>
    %167 = arith.subf %150, %166 : vector<16x32xf32>
    %cst_78 = arith.constant 9.99999974E-6 : f32
    %168 = vector.broadcast %cst_78 : f32 to vector<16x1xf32>
    %169 = arith.addf %165, %168 : vector<16x1xf32>
    %170 = math.rsqrt %169 : vector<16x1xf32>
    %171 = vector.broadcast %170 : vector<16x1xf32> to vector<16x32xf32>
    %172 = arith.mulf %167, %171 : vector<16x32xf32>
    %173 = vector.broadcast %152 : vector<1x32xf32> to vector<16x32xf32>
    %174 = arith.mulf %172, %173 : vector<16x32xf32>
    %175 = vector.broadcast %154 : vector<1x32xf32> to vector<16x32xf32>
    %176 = arith.addf %174, %175 : vector<16x32xf32>
    %c1_79 = arith.constant 1 : index
    %c0_80 = arith.constant 0 : index
    %c0_81 = arith.constant 0 : index
    %177 = vector.load %arg5[%c1_79, %c0_80, %c0_81] : memref<2x32x96xf32, #tpu.memory_space<vmem>>, vector<1x32x96xf32>
    %178 = vector.shape_cast %177 : vector<1x32x96xf32> to vector<32x96xf32>
    %cst_82 = arith.constant dense<0.000000e+00> : vector<16x96xf32>
    %179 = tpu.matmul %176, %178, %cst_82 {dimension_numbers = #tpu.dot_dimension_numbers<[1], [0], [0], [1], [0, 0, 1, 1], [], []>} : vector<16x32xf32>, vector<32x96xf32>, vector<16x96xf32> -> vector<16x96xf32>
    %c1_83 = arith.constant 1 : index
    %c0_84 = arith.constant 0 : index
    %c0_85 = arith.constant 0 : index
    %180 = vector.load %arg6[%c1_83, %c0_84, %c0_85] : memref<2x1x96xf32, #tpu.memory_space<vmem>>, vector<1x1x96xf32>
    %181 = vector.shape_cast %180 : vector<1x1x96xf32> to vector<1x96xf32>
    %182 = vector.broadcast %181 : vector<1x96xf32> to vector<16x96xf32>
    %183 = arith.addf %179, %182 : vector<16x96xf32>
    %184 = vector.extract_strided_slice %183 {offsets = [0, 0], sizes = [16, 16], strides = [1, 1]} : vector<16x96xf32> to vector<16x16xf32>
    %185 = vector.shape_cast %184 : vector<16x16xf32> to vector<2x8x16xf32>
    %186 = vector.extract_strided_slice %183 {offsets = [0, 32], sizes = [16, 16], strides = [1, 1]} : vector<16x96xf32> to vector<16x16xf32>
    %187 = vector.shape_cast %186 : vector<16x16xf32> to vector<2x8x16xf32>
    %188 = vector.extract_strided_slice %183 {offsets = [0, 64], sizes = [16, 16], strides = [1, 1]} : vector<16x96xf32> to vector<16x16xf32>
    %189 = vector.shape_cast %188 : vector<16x16xf32> to vector<2x8x16xf32>
    "tpu.trace_start"() <{level = 10 : i32, message = "bqd,bkd->bqk"}> : () -> ()
    %cst_86 = arith.constant dense<0.000000e+00> : vector<2x8x8xf32>
    %190 = tpu.matmul %185, %187, %cst_86 {dimension_numbers = #tpu.dot_dimension_numbers<[2], [2], [1], [1], [0, 0, 0, 1, 1, 1], [0], [0]>} : vector<2x8x16xf32>, vector<2x8x16xf32>, vector<2x8x8xf32> -> vector<2x8x8xf32>
    %cst_87 = arith.constant -1.000000e+30 : f32
    "tpu.trace_stop"() : () -> ()
    %191 = vector.broadcast %cst_87 : f32 to vector<2x8x8xf32>
    %192 = arith.select %12, %190, %191 : vector<2x8x8xi1>, vector<2x8x8xf32>
    %cst_88 = arith.constant dense<0xFF800000> : vector<2x8xf32>
    %193 = vector.multi_reduction <maximumf>, %192, %cst_88 [2] : vector<2x8x8xf32> to vector<2x8xf32>
    %194 = vector.shape_cast %193 : vector<2x8xf32> to vector<2x8x1xf32>
    %195 = vector.broadcast %194 : vector<2x8x1xf32> to vector<2x8x8xf32>
    %196 = arith.subf %192, %195 : vector<2x8x8xf32>
    %197 = math.exp %196 : vector<2x8x8xf32>
    %cst_89 = arith.constant dense<0.000000e+00> : vector<2x8xf32>
    %198 = vector.multi_reduction <add>, %197, %cst_89 [2] : vector<2x8x8xf32> to vector<2x8xf32>
    %199 = vector.shape_cast %198 : vector<2x8xf32> to vector<2x8x1xf32>
    %200 = tpu.reciprocal %199 {approx = true} : vector<2x8x1xf32> -> vector<2x8x1xf32>
    %201 = vector.broadcast %200 : vector<2x8x1xf32> to vector<2x8x8xf32>
    %202 = arith.mulf %197, %201 : vector<2x8x8xf32>
    "tpu.trace_start"() <{level = 10 : i32, message = "bqk,bkd->bqd"}> : () -> ()
    %cst_90 = arith.constant dense<0.000000e+00> : vector<2x8x16xf32>
    %203 = tpu.matmul %202, %189, %cst_90 {dimension_numbers = #tpu.dot_dimension_numbers<[2], [1], [1], [2], [0, 0, 0, 1, 1, 2], [0], [0]>} : vector<2x8x8xf32>, vector<2x8x16xf32>, vector<2x8x16xf32> -> vector<2x8x16xf32>
    "tpu.trace_stop"() : () -> ()
    %204 = vector.shape_cast %203 : vector<2x8x16xf32> to vector<16x16xf32>
    %205 = vector.extract_strided_slice %183 {offsets = [0, 16], sizes = [16, 16], strides = [1, 1]} : vector<16x96xf32> to vector<16x16xf32>
    %206 = vector.shape_cast %205 : vector<16x16xf32> to vector<2x8x16xf32>
    %207 = vector.extract_strided_slice %183 {offsets = [0, 48], sizes = [16, 16], strides = [1, 1]} : vector<16x96xf32> to vector<16x16xf32>
    %208 = vector.shape_cast %207 : vector<16x16xf32> to vector<2x8x16xf32>
    %209 = vector.extract_strided_slice %183 {offsets = [0, 80], sizes = [16, 16], strides = [1, 1]} : vector<16x96xf32> to vector<16x16xf32>
    %210 = vector.shape_cast %209 : vector<16x16xf32> to vector<2x8x16xf32>
    "tpu.trace_start"() <{level = 10 : i32, message = "bqd,bkd->bqk"}> : () -> ()
    %cst_91 = arith.constant dense<0.000000e+00> : vector<2x8x8xf32>
    %211 = tpu.matmul %206, %208, %cst_91 {dimension_numbers = #tpu.dot_dimension_numbers<[2], [2], [1], [1], [0, 0, 0, 1, 1, 1], [0], [0]>} : vector<2x8x16xf32>, vector<2x8x16xf32>, vector<2x8x8xf32> -> vector<2x8x8xf32>
    %cst_92 = arith.constant -1.000000e+30 : f32
    "tpu.trace_stop"() : () -> ()
    %212 = vector.broadcast %cst_92 : f32 to vector<2x8x8xf32>
    %213 = arith.select %12, %211, %212 : vector<2x8x8xi1>, vector<2x8x8xf32>
    %cst_93 = arith.constant dense<0xFF800000> : vector<2x8xf32>
    %214 = vector.multi_reduction <maximumf>, %213, %cst_93 [2] : vector<2x8x8xf32> to vector<2x8xf32>
    %215 = vector.shape_cast %214 : vector<2x8xf32> to vector<2x8x1xf32>
    %216 = vector.broadcast %215 : vector<2x8x1xf32> to vector<2x8x8xf32>
    %217 = arith.subf %213, %216 : vector<2x8x8xf32>
    %218 = math.exp %217 : vector<2x8x8xf32>
    %cst_94 = arith.constant dense<0.000000e+00> : vector<2x8xf32>
    %219 = vector.multi_reduction <add>, %218, %cst_94 [2] : vector<2x8x8xf32> to vector<2x8xf32>
    %220 = vector.shape_cast %219 : vector<2x8xf32> to vector<2x8x1xf32>
    %221 = tpu.reciprocal %220 {approx = true} : vector<2x8x1xf32> -> vector<2x8x1xf32>
    %222 = vector.broadcast %221 : vector<2x8x1xf32> to vector<2x8x8xf32>
    %223 = arith.mulf %218, %222 : vector<2x8x8xf32>
    "tpu.trace_start"() <{level = 10 : i32, message = "bqk,bkd->bqd"}> : () -> ()
    %cst_95 = arith.constant dense<0.000000e+00> : vector<2x8x16xf32>
    %224 = tpu.matmul %223, %210, %cst_95 {dimension_numbers = #tpu.dot_dimension_numbers<[2], [1], [1], [2], [0, 0, 0, 1, 1, 2], [0], [0]>} : vector<2x8x8xf32>, vector<2x8x16xf32>, vector<2x8x16xf32> -> vector<2x8x16xf32>
    "tpu.trace_stop"() : () -> ()
    %225 = vector.shape_cast %224 : vector<2x8x16xf32> to vector<16x16xf32>
    %226 = tpu.concatenate %204, %225 in 1 : vector<16x16xf32>, vector<16x16xf32> -> vector<16x32xf32>
    %c1_96 = arith.constant 1 : index
    %c0_97 = arith.constant 0 : index
    %c0_98 = arith.constant 0 : index
    %227 = vector.load %arg7[%c1_96, %c0_97, %c0_98] : memref<2x32x32xf32, #tpu.memory_space<vmem>>, vector<1x32x32xf32>
    %228 = vector.shape_cast %227 : vector<1x32x32xf32> to vector<32x32xf32>
    %cst_99 = arith.constant dense<0.000000e+00> : vector<16x32xf32>
    %229 = tpu.matmul %226, %228, %cst_99 {dimension_numbers = #tpu.dot_dimension_numbers<[1], [0], [0], [1], [0, 0, 1, 1], [], []>} : vector<16x32xf32>, vector<32x32xf32>, vector<16x32xf32> -> vector<16x32xf32>
    %230 = arith.addf %150, %229 : vector<16x32xf32>
    %c1_100 = arith.constant 1 : index
    %c0_101 = arith.constant 0 : index
    %c0_102 = arith.constant 0 : index
    %231 = vector.load %arg8[%c1_100, %c0_101, %c0_102] : memref<2x1x32xf32, #tpu.memory_space<vmem>>, vector<1x1x32xf32>
    %232 = vector.shape_cast %231 : vector<1x1x32xf32> to vector<1x32xf32>
    %233 = vector.broadcast %232 : vector<1x32xf32> to vector<16x32xf32>
    %234 = arith.addf %230, %233 : vector<16x32xf32>
    %c1_103 = arith.constant 1 : index
    %c0_104 = arith.constant 0 : index
    %c0_105 = arith.constant 0 : index
    %235 = vector.load %arg9[%c1_103, %c0_104, %c0_105] : memref<2x1x32xf32, #tpu.memory_space<vmem>>, vector<1x1x32xf32>
    %236 = vector.shape_cast %235 : vector<1x1x32xf32> to vector<1x32xf32>
    %c1_106 = arith.constant 1 : index
    %c0_107 = arith.constant 0 : index
    %c0_108 = arith.constant 0 : index
    %237 = vector.load %arg10[%c1_106, %c0_107, %c0_108] : memref<2x1x32xf32, #tpu.memory_space<vmem>>, vector<1x1x32xf32>
    %238 = vector.shape_cast %237 : vector<1x1x32xf32> to vector<1x32xf32>
    %cst_109 = arith.constant dense<0.000000e+00> : vector<16xf32>
    %239 = vector.multi_reduction <add>, %234, %cst_109 [1] : vector<16x32xf32> to vector<16xf32>
    %240 = vector.shape_cast %239 : vector<16xf32> to vector<16x1xf32>
    %cst_110 = arith.constant 3.200000e+01 : f32
    %241 = vector.broadcast %cst_110 : f32 to vector<16x1xf32>
    %242 = arith.divf %240, %241 : vector<16x1xf32>
    %243 = arith.mulf %234, %234 : vector<16x32xf32>
    %cst_111 = arith.constant dense<0.000000e+00> : vector<16xf32>
    %244 = vector.multi_reduction <add>, %243, %cst_111 [1] : vector<16x32xf32> to vector<16xf32>
    %245 = vector.shape_cast %244 : vector<16xf32> to vector<16x1xf32>
    %cst_112 = arith.constant 3.200000e+01 : f32
    %246 = vector.broadcast %cst_112 : f32 to vector<16x1xf32>
    %247 = arith.divf %245, %246 : vector<16x1xf32>
    %248 = arith.mulf %242, %242 : vector<16x1xf32>
    %249 = arith.subf %247, %248 : vector<16x1xf32>
    %250 = vector.broadcast %242 : vector<16x1xf32> to vector<16x32xf32>
    %251 = arith.subf %234, %250 : vector<16x32xf32>
    %cst_113 = arith.constant 9.99999974E-6 : f32
    %252 = vector.broadcast %cst_113 : f32 to vector<16x1xf32>
    %253 = arith.addf %249, %252 : vector<16x1xf32>
    %254 = math.rsqrt %253 : vector<16x1xf32>
    %255 = vector.broadcast %254 : vector<16x1xf32> to vector<16x32xf32>
    %256 = arith.mulf %251, %255 : vector<16x32xf32>
    %257 = vector.broadcast %236 : vector<1x32xf32> to vector<16x32xf32>
    %258 = arith.mulf %256, %257 : vector<16x32xf32>
    %259 = vector.broadcast %238 : vector<1x32xf32> to vector<16x32xf32>
    %260 = arith.addf %258, %259 : vector<16x32xf32>
    %c1_114 = arith.constant 1 : index
    %c0_115 = arith.constant 0 : index
    %c0_116 = arith.constant 0 : index
    %261 = vector.load %arg11[%c1_114, %c0_115, %c0_116] : memref<2x32x128xf32, #tpu.memory_space<vmem>>, vector<1x32x128xf32>
    %262 = vector.shape_cast %261 : vector<1x32x128xf32> to vector<32x128xf32>
    %cst_117 = arith.constant dense<0.000000e+00> : vector<16x128xf32>
    %263 = tpu.matmul %260, %262, %cst_117 {dimension_numbers = #tpu.dot_dimension_numbers<[1], [0], [0], [1], [0, 0, 1, 1], [], []>} : vector<16x32xf32>, vector<32x128xf32>, vector<16x128xf32> -> vector<16x128xf32>
    %c1_118 = arith.constant 1 : index
    %c0_119 = arith.constant 0 : index
    %c0_120 = arith.constant 0 : index
    %264 = vector.load %arg12[%c1_118, %c0_119, %c0_120] : memref<2x1x128xf32, #tpu.memory_space<vmem>>, vector<1x1x128xf32>
    %265 = vector.shape_cast %264 : vector<1x1x128xf32> to vector<1x128xf32>
    %266 = vector.broadcast %265 : vector<1x128xf32> to vector<16x128xf32>
    %267 = arith.addf %263, %266 : vector<16x128xf32>
    %268 = arith.mulf %267, %267 : vector<16x128xf32>
    %269 = arith.mulf %267, %268 : vector<16x128xf32>
    %cst_121 = arith.constant 4.471500e-02 : f32
    %270 = vector.broadcast %cst_121 : f32 to vector<16x128xf32>
    %271 = arith.mulf %270, %269 : vector<16x128xf32>
    %272 = arith.addf %267, %271 : vector<16x128xf32>
    %cst_122 = arith.constant 0.797884583 : f32
    %273 = vector.broadcast %cst_122 : f32 to vector<16x128xf32>
    %274 = arith.mulf %273, %272 : vector<16x128xf32>
    %275 = math.tanh %274 : vector<16x128xf32>
    %cst_123 = arith.constant 1.000000e+00 : f32
    %276 = vector.broadcast %cst_123 : f32 to vector<16x128xf32>
    %277 = arith.addf %276, %275 : vector<16x128xf32>
    %cst_124 = arith.constant 5.000000e-01 : f32
    %278 = vector.broadcast %cst_124 : f32 to vector<16x128xf32>
    %279 = arith.mulf %278, %277 : vector<16x128xf32>
    %280 = arith.mulf %267, %279 : vector<16x128xf32>
    %c1_125 = arith.constant 1 : index
    %c0_126 = arith.constant 0 : index
    %c0_127 = arith.constant 0 : index
    %281 = vector.load %arg13[%c1_125, %c0_126, %c0_127] : memref<2x128x32xf32, #tpu.memory_space<vmem>>, vector<1x128x32xf32>
    %282 = vector.shape_cast %281 : vector<1x128x32xf32> to vector<128x32xf32>
    %cst_128 = arith.constant dense<0.000000e+00> : vector<16x32xf32>
    %283 = tpu.matmul %280, %282, %cst_128 {dimension_numbers = #tpu.dot_dimension_numbers<[1], [0], [0], [1], [0, 0, 1, 1], [], []>} : vector<16x128xf32>, vector<128x32xf32>, vector<16x32xf32> -> vector<16x32xf32>
    %c1_129 = arith.constant 1 : index
    %c0_130 = arith.constant 0 : index
    %c0_131 = arith.constant 0 : index
    %284 = vector.load %arg14[%c1_129, %c0_130, %c0_131] : memref<2x1x32xf32, #tpu.memory_space<vmem>>, vector<1x1x32xf32>
    %285 = vector.shape_cast %284 : vector<1x1x32xf32> to vector<1x32xf32>
    %286 = vector.broadcast %285 : vector<1x32xf32> to vector<16x32xf32>
    %287 = arith.addf %283, %286 : vector<16x32xf32>
    %288 = arith.addf %234, %287 : vector<16x32xf32>
    %289 = vector.shape_cast %288 : vector<16x32xf32> to vector<2x8x32xf32>
    %290 = vector.extract_strided_slice %289 {offsets = [0, 7, 0], sizes = [2, 1, 32], strides = [1, 1, 1]} : vector<2x8x32xf32> to vector<2x1x32xf32>
    %291 = vector.shape_cast %290 : vector<2x1x32xf32> to vector<2x32xf32>
    %c0_132 = arith.constant 0 : index
    %c0_133 = arith.constant 0 : index
    %292 = vector.load %arg15[%c0_132, %c0_133] : memref<1x32xf32, #tpu.memory_space<vmem>>, vector<1x32xf32>
    %c0_134 = arith.constant 0 : index
    %c0_135 = arith.constant 0 : index
    %293 = vector.load %arg16[%c0_134, %c0_135] : memref<1x32xf32, #tpu.memory_space<vmem>>, vector<1x32xf32>
    %cst_136 = arith.constant dense<0.000000e+00> : vector<2xf32>
    %294 = vector.multi_reduction <add>, %291, %cst_136 [1] : vector<2x32xf32> to vector<2xf32>
    %295 = vector.shape_cast %294 : vector<2xf32> to vector<2x1xf32>
    %cst_137 = arith.constant 3.200000e+01 : f32
    %296 = vector.broadcast %cst_137 : f32 to vector<2x1xf32>
    %297 = arith.divf %295, %296 : vector<2x1xf32>
    %298 = arith.mulf %291, %291 : vector<2x32xf32>
    %cst_138 = arith.constant dense<0.000000e+00> : vector<2xf32>
    %299 = vector.multi_reduction <add>, %298, %cst_138 [1] : vector<2x32xf32> to vector<2xf32>
    %300 = vector.shape_cast %299 : vector<2xf32> to vector<2x1xf32>
    %cst_139 = arith.constant 3.200000e+01 : f32
    %301 = vector.broadcast %cst_139 : f32 to vector<2x1xf32>
    %302 = arith.divf %300, %301 : vector<2x1xf32>
    %303 = arith.mulf %297, %297 : vector<2x1xf32>
    %304 = arith.subf %302, %303 : vector<2x1xf32>
    %305 = vector.broadcast %297 : vector<2x1xf32> to vector<2x32xf32>
    %306 = arith.subf %291, %305 : vector<2x32xf32>
    %cst_140 = arith.constant 9.99999974E-6 : f32
    %307 = vector.broadcast %cst_140 : f32 to vector<2x1xf32>
    %308 = arith.addf %304, %307 : vector<2x1xf32>
    %309 = math.rsqrt %308 : vector<2x1xf32>
    %310 = vector.broadcast %309 : vector<2x1xf32> to vector<2x32xf32>
    %311 = arith.mulf %306, %310 : vector<2x32xf32>
    %312 = vector.broadcast %292 : vector<1x32xf32> to vector<2x32xf32>
    %313 = arith.mulf %311, %312 : vector<2x32xf32>
    %314 = vector.broadcast %293 : vector<1x32xf32> to vector<2x32xf32>
    %315 = arith.addf %313, %314 : vector<2x32xf32>
    %c0_141 = arith.constant 0 : index
    %c0_142 = arith.constant 0 : index
    %316 = vector.load %arg17[%c0_141, %c0_142] : memref<32x128xf32, #tpu.memory_space<vmem>>, vector<32x128xf32>
    %cst_143 = arith.constant dense<0.000000e+00> : vector<2x128xf32>
    %317 = tpu.matmul %315, %316, %cst_143 {dimension_numbers = #tpu.dot_dimension_numbers<[1], [0], [0], [1], [0, 0, 1, 1], [], []>} : vector<2x32xf32>, vector<32x128xf32>, vector<2x128xf32> -> vector<2x128xf32>
    %c0_144 = arith.constant 0 : index
    %c0_145 = arith.constant 0 : index
    %318 = vector.load %arg18[%c0_144, %c0_145] : memref<1x128xf32, #tpu.memory_space<vmem>>, vector<1x128xf32>
    %319 = vector.broadcast %318 : vector<1x128xf32> to vector<2x128xf32>
    %320 = arith.addf %317, %319 : vector<2x128xf32>
    %c0_146 = arith.constant 0 : index
    %c0_147 = arith.constant 0 : index
    %321 = vector.load %arg19[%c0_146, %c0_147] : memref<2x128xf32, #tpu.memory_space<vmem>>, vector<2x128xf32>
    tpu.vector_store %arg19[%c0_146, %c0_147], %320 {strides = array<i32>} : memref<2x128xf32, #tpu.memory_space<vmem>>, vector<2x128xf32>,
    return
  }
}

</mosaic_0001>

<llo_original>
// kernel: gpt_forward.1
$region0: #{gpt_forward.1}
  #allocation0 [shape = 'u32[]', space=smem, size = 0x4, offset = 0x4, fixed_abs, tag = 'smem constant byte address 0x4 - core index']
  #allocation1 [shape = 'u32[72,128]{1,0:T(1,128)}', space=vmem, size = 0x9000, scoped, tag = 'internal scratch']
  %s0 = inlined_call_operand.vmem [shape: s32[16,1], index: 0, kind: input, shape index: {}]
  %s1 = inlined_call_operand.vmem [shape: f32[64,32], index: 1, kind: input, shape index: {}]
  %s2 = inlined_call_operand.vmem [shape: f32[16,32], index: 2, kind: input, shape index: {}]
  %s3 = inlined_call_operand.vmem [shape: f32[2,1,32], index: 3, kind: input, shape index: {}]
  %s4 = inlined_call_operand.vmem [shape: f32[2,1,32], index: 4, kind: input, shape index: {}]
  %s5 = inlined_call_operand.vmem [shape: f32[2,32,96], index: 5, kind: input, shape index: {}]
  %s6 = inlined_call_operand.vmem [shape: f32[2,1,96], index: 6, kind: input, shape index: {}]
  %s7 = inlined_call_operand.vmem [shape: f32[2,32,32], index: 7, kind: input, shape index: {}]
  %s8 = inlined_call_operand.vmem [shape: f32[2,1,32], index: 8, kind: input, shape index: {}]
  %s9 = inlined_call_operand.vmem [shape: f32[2,1,32], index: 9, kind: input, shape index: {}]
  %s10 = inlined_call_operand.vmem [shape: f32[2,1,32], index: 10, kind: input, shape index: {}]
  %s11 = inlined_call_operand.vmem [shape: f32[2,32,128], index: 11, kind: input, shape index: {}]
  %s12 = inlined_call_operand.vmem [shape: f32[2,1,128], index: 12, kind: input, shape index: {}]
  %s13 = inlined_call_operand.vmem [shape: f32[2,128,32], index: 13, kind: input, shape index: {}]
  %s14 = inlined_call_operand.vmem [shape: f32[2,1,32], index: 14, kind: input, shape index: {}]
  %s15 = inlined_call_operand.vmem [shape: f32[1,32], index: 15, kind: input, shape index: {}]
  %s16 = inlined_call_operand.vmem [shape: f32[1,32], index: 16, kind: input, shape index: {}]
  %s17 = inlined_call_operand.vmem [shape: f32[32,128], index: 17, kind: input, shape index: {}]
  %s18 = inlined_call_operand.vmem [shape: f32[1,128], index: 18, kind: input, shape index: {}]
  %s19 = inlined_call_operand.vmem [shape: f32[2,128], index: 19, kind: output, shape index: {}]
  %s20 = sld [smem:[#allocation0]]
  $region86: #{gpt_forward.1} parent=0
    _
  %s22 = ssub.s32 1, %s20
  %s23 = scalar_select 0, %s22, %s20
  // Predicated region
  $region2: #{gpt_forward.1} parent=0 // pred_check
    _
  $region3: #{gpt_forward.1} parent=0 // pred_check_branch
    %25 = sbr.rel (0) target = $region5
  $region4: #{gpt_forward.1} parent=0 // pred_region
    _
  $region5: #{gpt_forward.1} parent=0 // pred_fallthru
    _
  // Predicated region
  $region6: #{gpt_forward.1} parent=0 // pred_check
    _
  $region7: #{gpt_forward.1} parent=0 // pred_check_branch
    %27 = sbr.rel (0) target = $region9
  $region8: #{gpt_forward.1} parent=0 // pred_region
    _
  $region9: #{gpt_forward.1} parent=0 // pred_fallthru
    _
  // Predicated region
  $region10: #{gpt_forward.1} parent=0 // pred_check
    _
  $region11: #{gpt_forward.1} parent=0 // pred_check_branch
    %29 = sbr.rel (0) target = $region13
  $region12: #{gpt_forward.1} parent=0 // pred_region
    _
  $region13: #{gpt_forward.1} parent=0 // pred_fallthru
    _
  // Predicated region
  $region14: #{gpt_forward.1} parent=0 // pred_check
    _
  $region15: #{gpt_forward.1} parent=0 // pred_check_branch
    %31 = sbr.rel (0) target = $region17
  $region16: #{gpt_forward.1} parent=0 // pred_region
    _
  $region17: #{gpt_forward.1} parent=0 // pred_fallthru
    _
  // Predicated region
  $region18: #{gpt_forward.1} parent=0 // pred_check
    _
  $region19: #{gpt_forward.1} parent=0 // pred_check_branch
    %33 = sbr.rel (0) target = $region21
  $region20: #{gpt_forward.1} parent=0 // pred_region
    _
  $region21: #{gpt_forward.1} parent=0 // pred_fallthru
    _
  // Predicated region
  $region22: #{gpt_forward.1} parent=0 // pred_check
    _
  $region23: #{gpt_forward.1} parent=0 // pred_check_branch
    %35 = sbr.rel (0) target = $region25
  $region24: #{gpt_forward.1} parent=0 // pred_region
    _
  $region25: #{gpt_forward.1} parent=0 // pred_fallthru
    _
  // Predicated region
  $region26: #{gpt_forward.1} parent=0 // pred_check
    _
  $region27: #{gpt_forward.1} parent=0 // pred_check_branch
    %37 = sbr.rel (0) target = $region29
  $region28: #{gpt_forward.1} parent=0 // pred_region
    _
  $region29: #{gpt_forward.1} parent=0 // pred_fallthru
    _
  // Predicated region
  $region30: #{gpt_forward.1} parent=0 // pred_check
    _
  $region31: #{gpt_forward.1} parent=0 // pred_check_branch
    %39 = sbr.rel (0) target = $region33
  $region32: #{gpt_forward.1} parent=0 // pred_region
    _
  $region33: #{gpt_forward.1} parent=0 // pred_fallthru
    _
  // Predicated region
  $region34: #{gpt_forward.1} parent=0 // pred_check
    _
  $region35: #{gpt_forward.1} parent=0 // pred_check_branch
    %41 = sbr.rel (0) target = $region37
  $region36: #{gpt_forward.1} parent=0 // pred_region
    _
  $region37: #{gpt_forward.1} parent=0 // pred_fallthru
    _
  // Predicated region
  $region38: #{gpt_forward.1} parent=0 // pred_check
    _
  $region39: #{gpt_forward.1} parent=0 // pred_check_branch
    %43 = sbr.rel (0) target = $region41
  $region40: #{gpt_forward.1} parent=0 // pred_region
    _
  $region41: #{gpt_forward.1} parent=0 // pred_fallthru
    _
  // Predicated region
  $region42: #{gpt_forward.1} parent=0 // pred_check
    _
  $region43: #{gpt_forward.1} parent=0 // pred_check_branch
    %45 = sbr.rel (0) target = $region45
  $region44: #{gpt_forward.1} parent=0 // pred_region
    _
  $region45: #{gpt_forward.1} parent=0 // pred_fallthru
    _
  // Predicated region
  $region46: #{gpt_forward.1} parent=0 // pred_check
    _
  $region47: #{gpt_forward.1} parent=0 // pred_check_branch
    %47 = sbr.rel (0) target = $region49
  $region48: #{gpt_forward.1} parent=0 // pred_region
    _
  $region49: #{gpt_forward.1} parent=0 // pred_fallthru
    _
  // Predicated region
  $region50: #{gpt_forward.1} parent=0 // pred_check
    _
  $region51: #{gpt_forward.1} parent=0 // pred_check_branch
    %49 = sbr.rel (0) target = $region53
  $region52: #{gpt_forward.1} parent=0 // pred_region
    _
  $region53: #{gpt_forward.1} parent=0 // pred_fallthru
    _
  // Predicated region
  $region54: #{gpt_forward.1} parent=0 // pred_check
    _
  $region55: #{gpt_forward.1} parent=0 // pred_check_branch
    %51 = sbr.rel (0) target = $region57
  $region56: #{gpt_forward.1} parent=0 // pred_region
    _
  $region57: #{gpt_forward.1} parent=0 // pred_fallthru
    _
  // Predicated region
  $region58: #{gpt_forward.1} parent=0 // pred_check
    _
  $region59: #{gpt_forward.1} parent=0 // pred_check_branch
    %53 = sbr.rel (0) target = $region61
  $region60: #{gpt_forward.1} parent=0 // pred_region
    _
  $region61: #{gpt_forward.1} parent=0 // pred_fallthru
    _
  // Predicated region
  $region62: #{gpt_forward.1} parent=0 // pred_check
    _
  $region63: #{gpt_forward.1} parent=0 // pred_check_branch
    %55 = sbr.rel (0) target = $region65
  $region64: #{gpt_forward.1} parent=0 // pred_region
    _
  $region65: #{gpt_forward.1} parent=0 // pred_fallthru
    _
  // Predicated region
  $region66: #{gpt_forward.1} parent=0 // pred_check
    _
  $region67: #{gpt_forward.1} parent=0 // pred_check_branch
    %57 = sbr.rel (0) target = $region69
  $region68: #{gpt_forward.1} parent=0 // pred_region
    _
  $region69: #{gpt_forward.1} parent=0 // pred_fallthru
    _
  // Predicated region
  $region70: #{gpt_forward.1} parent=0 // pred_check
    _
  $region71: #{gpt_forward.1} parent=0 // pred_check_branch
    %59 = sbr.rel (0) target = $region73
  $region72: #{gpt_forward.1} parent=0 // pred_region
    _
  $region73: #{gpt_forward.1} parent=0 // pred_fallthru
    _
  // Predicated region
  $region74: #{gpt_forward.1} parent=0 // pred_check
    _
  $region75: #{gpt_forward.1} parent=0 // pred_check_branch
    %61 = sbr.rel (0) target = $region77
  $region76: #{gpt_forward.1} parent=0 // pred_region
    _
  $region77: #{gpt_forward.1} parent=0 // pred_fallthru
    _
  %v62 = vld [vmem:[%s0] sm:$0xff]
  %v63 = vld [vmem:[%s0 + $0x8] sm:$0xff]
  %v64 = vlaneseq
  %v65 = vand.u32 %v64, 127
  %66 = vset.pattern.permute.xlu0 0
  %67 = vperm.xlu0 %66, %v62
  %v68 = vpop.permute.xlu0 %67
  %69 = vset.pattern.permute.xlu0 0
  %70 = vperm.xlu0 %69, %v63
  %v71 = vpop.permute.xlu0 %70
  %vm72 = vcmp.eq.s32.totalorder %v65, %v68
  %vm73 = vcmp.eq.s32.totalorder %v65, %v71
  %v74 = vsel %vm72, 1, 0
  %v75 = vsel %vm73, 1, 0
  %v76 = vcvt.s32.f32 %v74
  %v77 = vcvt.s32.f32 %v75
  %v78 = vld [vmem:[%s1] sm:$0xff]
  %v79 = vld [vmem:[%s1 + $0x8] sm:$0xff]
  %v80 = vld [vmem:[%s1 + $0x10] sm:$0xff]
  %v81 = vld [vmem:[%s1 + $0x18] sm:$0xff]
  %v82 = vld [vmem:[%s1 + $0x20] sm:$0xff]
  %v83 = vld [vmem:[%s1 + $0x28] sm:$0xff]
  %v84 = vld [vmem:[%s1 + $0x30] sm:$0xff]
  %v85 = vld [vmem:[%s1 + $0x38] sm:$0xff]
  %v86 = vld [vmem:[%s2] sm:$0xff]
  %v87 = vld [vmem:[%s2 + $0x8] sm:$0xff]
  %vm88 = vcmask 523264
  %v90 = vsel %vm88, %v76, 0
  %v93 = vsel %vm88, %v77, 0
  %95 = vmatpush.msra.mxu0 0.0
  %96 = vmatpush.msra.mxu0 0.0
  %97 = vmatpush.msra.mxu0 0.0
  %98 = vmatpush.msra.mxu0 0.0
  %99 = vmatpush.msra.mxu0 0.0
  %100 = vmatpush.msra.mxu0 0.0
  %101 = vmatpush.msra.mxu0 0.0
  %102 = vmatpush.msra.mxu0 0.0
  %103 = vmatpush.msra.mxu0 %v85
  %104 = vmatpush.msra.mxu0 %v84
  %105 = vmatpush.msra.mxu0 %v83
  %106 = vmatpush.msra.mxu0 %v82
  %107 = vmatpush.msra.mxu0 %v81
  %108 = vmatpush.msra.mxu0 %v80
  %109 = vmatpush.msra.mxu0 %v79
  %110 = vmatpush.msra.mxu0 %v78
  %111 = vmatmul.f32.gmra.mxu0 %v90
  %v112 = vpop.f32.mrf.mxu0
  %v113 = vadd.f32 %v86, %v112
  %114 = vmatmul.f32.gmra.mxu0 %v93
  %v115 = vpop.f32.mrf.mxu0
  %v116 = vadd.f32 %v87, %v115
  %117 = vdwg.mxu0
  %v118 = vlaneseq
  %v119 = vshrl.u32 %v118, 7
  %vm120 = vcmp.ge.s32.totalorder %v119, %v65
  %v121 = vld [vmem:[%s3] sm:$0x1]
  %v122 = vld [vmem:[%s4] sm:$0x1]
  %vm123 = vcmask 261120
  %v124 = vsel %vm123, %v113, 0.0
  %125 = vadd.xlane.f32.xlu0 %v124
  %v126 = vpop.xlane.xlu0 %125
  %v127 = vsel %vm123, %v116, 0.0
  %128 = vadd.xlane.f32.xlu0 %v127
  %v129 = vpop.xlane.xlu0 %128
  %v130 = vrcp.pop 32.0
  %v131 = vmul.f32 32.0, %v130
  %v132 = vsub.f32 1.0, %v131
  %v133 = vmul.f32 %v130, %v132
  %v134 = vadd.f32 %v130, %v133
  %vm135 = vweird.f32 %v130
  %v136 = vsel %vm135, %v130, %v134
  %v137 = vmul.f32 %v126, %v136
  %v138 = vmul.f32 %v129, %v136
  %v139 = vmul.f32 %v113, %v113
  %v140 = vmul.f32 %v116, %v116
  %v141 = vsel %vm123, %v139, 0.0
  %142 = vadd.xlane.f32.xlu0 %v141
  %v143 = vpop.xlane.xlu0 %142
  %v144 = vsel %vm123, %v140, 0.0
  %145 = vadd.xlane.f32.xlu0 %v144
  %v146 = vpop.xlane.xlu0 %145
  %v147 = vmul.f32 %v143, %v136
  %v148 = vmul.f32 %v146, %v136
  %v149 = vmul.f32 %v137, %v137
  %v150 = vmul.f32 %v138, %v138
  %v151 = vsub.f32 %v147, %v149
  %v152 = vsub.f32 %v148, %v150
  %v153 = vsub.f32 %v113, %v137
  %v154 = vsub.f32 %v116, %v138
  %v155 = vadd.f32 %v151, 1e-05
  %v156 = vadd.f32 %v152, 1e-05
  %v157 = vrsqrt.pop %v155
  %v158 = vmul.f32 %v157, %v155
  %v159 = vmul.f32 %v158, %v157
  %v160 = vmul.f32 0.5, %v159
  %v161 = vsub.f32 1.5, %v160
  %v162 = vmul.f32 %v157, %v161
  %vm163 = vweird.f32 %v155
  %vm164 = vweird.f32 %v157
  %vm165 = vmor %vm163, %vm164
  %v166 = vsel %vm165, %v157, %v162
  %v167 = vrsqrt.pop %v156
  %v168 = vmul.f32 %v167, %v156
  %v169 = vmul.f32 %v168, %v167
  %v170 = vmul.f32 0.5, %v169
  %v171 = vsub.f32 1.5, %v170
  %v172 = vmul.f32 %v167, %v171
  %vm173 = vweird.f32 %v156
  %vm174 = vweird.f32 %v167
  %vm175 = vmor %vm173, %vm174
  %v176 = vsel %vm175, %v167, %v172
  %v177 = vmul.f32 %v153, %v166
  %v178 = vmul.f32 %v154, %v176
  %v180 = vperm.slane %v121, 0
  %v182 = vmul.f32 %v177, %v180
  %v183 = vmul.f32 %v178, %v180
  %v185 = vperm.slane %v122, 0
  %v187 = vadd.f32 %v182, %v185
  %v188 = vadd.f32 %v183, %v185
  %v189 = vld [vmem:[%s5] sm:$0xff]
  %v190 = vld [vmem:[%s5 + $0x8] sm:$0xff]
  %v191 = vld [vmem:[%s5 + $0x10] sm:$0xff]
  %v192 = vld [vmem:[%s5 + $0x18] sm:$0xff]
  %v193 = vld [vmem:[%s6] sm:$0x1]
  %v195 = vperm.slane %v193, 0
  %v198 = vsel %vm123, %v187, 0
  %v201 = vsel %vm123, %v188, 0
  %203 = vmatpush.msra.mxu0 0.0
  %204 = vmatpush.msra.mxu0 0.0
  %205 = vmatpush.msra.mxu0 0.0
  %206 = vmatpush.msra.mxu0 0.0
  %207 = vmatpush.msra.mxu0 0.0
  %208 = vmatpush.msra.mxu0 0.0
  %209 = vmatpush.msra.mxu0 0.0
  %210 = vmatpush.msra.mxu0 0.0
  %211 = vmatpush.msra.mxu0 0.0
  %212 = vmatpush.msra.mxu0 0.0
  %213 = vmatpush.msra.mxu0 0.0
  %214 = vmatpush.msra.mxu0 0.0
  %215 = vmatpush.msra.mxu0 %v192
  %216 = vmatpush.msra.mxu0 %v191
  %217 = vmatpush.msra.mxu0 %v190
  %218 = vmatpush.msra.mxu0 %v189
  %219 = vmatmul.f32.gmra.mxu0 %v198
  %v220 = vpop.f32.mrf.mxu0
  %v221 = vadd.f32 %v195, %v220
  %222 = vmatmul.f32.gmra.mxu0 %v201
  %v223 = vpop.f32.mrf.mxu0
  %v224 = vadd.f32 %v195, %v223
  %225 = vdwg.mxu0
  %227 = vrot.lane.b32.xlu0 %v221, 96
  %v228 = vpop.permute.xlu0 %227
  %vm229 = vcmask 130048
  %v230 = vsel %vm229, %v221, 0
  %v232 = vsel %vm229, %v228, 0
  %234 = vmatpush.xpose.msra.mxu0 0.0
  %235 = vmatpush.xpose.msra.mxu0 0.0
  %236 = vmatpush.xpose.msra.mxu0 0.0
  %237 = vmatpush.xpose.msra.mxu0 0.0
  %238 = vmatpush.xpose.msra.mxu0 0.0
  %239 = vmatpush.xpose.msra.mxu0 0.0
  %240 = vmatpush.xpose.msra.mxu0 0.0
  %241 = vmatpush.xpose.msra.mxu0 0.0
  %242 = vmatpush.xpose.msra.mxu0 0.0
  %243 = vmatpush.xpose.msra.mxu0 0.0
  %244 = vmatpush.xpose.msra.mxu0 0.0
  %245 = vmatpush.xpose.msra.mxu0 0.0
  %246 = vmatpush.xpose.msra.mxu0 0.0
  %247 = vmatpush.xpose.msra.mxu0 0.0
  %248 = vmatpush.xpose.msra.mxu0 0.0
  %249 = vmatpush.xpose.msra.mxu0 %v232
  %250 = vmatmul.f32.gmra.mxu0 %v230
  %v251 = vpop.f32.mrf.mxu0
  %v252 = vadd.f32 0.0, %v251
  %253 = vdwg.mxu0
  %255 = vrot.lane.b32.xlu0 %v224, 96
  %v256 = vpop.permute.xlu0 %255
  %v257 = vsel %vm229, %v224, 0
  %v259 = vsel %vm229, %v256, 0
  %261 = vmatpush.xpose.msra.mxu0 0.0
  %262 = vmatpush.xpose.msra.mxu0 0.0
  %263 = vmatpush.xpose.msra.mxu0 0.0
  %264 = vmatpush.xpose.msra.mxu0 0.0
  %265 = vmatpush.xpose.msra.mxu0 0.0
  %266 = vmatpush.xpose.msra.mxu0 0.0
  %267 = vmatpush.xpose.msra.mxu0 0.0
  %268 = vmatpush.xpose.msra.mxu0 0.0
  %269 = vmatpush.xpose.msra.mxu0 0.0
  %270 = vmatpush.xpose.msra.mxu0 0.0
  %271 = vmatpush.xpose.msra.mxu0 0.0
  %272 = vmatpush.xpose.msra.mxu0 0.0
  %273 = vmatpush.xpose.msra.mxu0 0.0
  %274 = vmatpush.xpose.msra.mxu0 0.0
  %275 = vmatpush.xpose.msra.mxu0 0.0
  %276 = vmatpush.xpose.msra.mxu0 %v259
  %277 = vmatmul.f32.gmra.mxu0 %v257
  %v278 = vpop.f32.mrf.mxu0
  %v279 = vadd.f32 0.0, %v278
  %280 = vdwg.mxu0
  %v281 = vsel %vm120, %v252, -1e+30
  %v282 = vsel %vm120, %v279, -1e+30
  %vm283 = vcmask 64512
  %v284 = vsel %vm283, %v281, -inf
  %285 = vmax.xlane.f32.xlu0 %v284
  %v286 = vpop.xlane.xlu0 %285
  %v287 = vsel %vm283, %v282, -inf
  %288 = vmax.xlane.f32.xlu0 %v287
  %v289 = vpop.xlane.xlu0 %288
  %v290 = vsub.f32 %v281, %v286
  %v291 = vsub.f32 %v282, %v289
  %v292 = vmul.f32 %v290, 1.442695
  %v293 = vpow.pop %v292
  %v294 = vmul.f32 %v291, 1.442695
  %v295 = vpow.pop %v294
  %v296 = vsel %vm283, %v293, 0.0
  %297 = vadd.xlane.f32.xlu0 %v296
  %v298 = vpop.xlane.xlu0 %297
  %v299 = vsel %vm283, %v295, 0.0
  %300 = vadd.xlane.f32.xlu0 %v299
  %v301 = vpop.xlane.xlu0 %300
  %v302 = vrcp.pop %v298
  %v303 = vrcp.pop %v301
  %v304 = vmul.f32 %v293, %v302
  %v305 = vmul.f32 %v295, %v303
  %306 = vrot.lane.b32.xlu0 %v221, 64
  %v307 = vpop.permute.xlu0 %306
  %v310 = vsel %vm283, %v304, 0
  %312 = vmatpush.msra.mxu0 0.0
  %313 = vmatpush.msra.mxu0 0.0
  %314 = vmatpush.msra.mxu0 0.0
  %315 = vmatpush.msra.mxu0 0.0
  %316 = vmatpush.msra.mxu0 0.0
  %317 = vmatpush.msra.mxu0 0.0
  %318 = vmatpush.msra.mxu0 0.0
  %319 = vmatpush.msra.mxu0 0.0
  %320 = vmatpush.msra.mxu0 0.0
  %321 = vmatpush.msra.mxu0 0.0
  %322 = vmatpush.msra.mxu0 0.0
  %323 = vmatpush.msra.mxu0 0.0
  %324 = vmatpush.msra.mxu0 0.0
  %325 = vmatpush.msra.mxu0 0.0
  %326 = vmatpush.msra.mxu0 0.0
  %327 = vmatpush.msra.mxu0 %v307
  %328 = vmatmul.f32.gmra.mxu0 %v310
  %v329 = vpop.f32.mrf.mxu0
  %v330 = vadd.f32 0.0, %v329
  %331 = vdwg.mxu0
  %332 = vrot.lane.b32.xlu0 %v224, 64
  %v333 = vpop.permute.xlu0 %332
  %v336 = vsel %vm283, %v305, 0
  %338 = vmatpush.msra.mxu0 0.0
  %339 = vmatpush.msra.mxu0 0.0
  %340 = vmatpush.msra.mxu0 0.0
  %341 = vmatpush.msra.mxu0 0.0
  %342 = vmatpush.msra.mxu0 0.0
  %343 = vmatpush.msra.mxu0 0.0
  %344 = vmatpush.msra.mxu0 0.0
  %345 = vmatpush.msra.mxu0 0.0
  %346 = vmatpush.msra.mxu0 0.0
  %347 = vmatpush.msra.mxu0 0.0
  %348 = vmatpush.msra.mxu0 0.0
  %349 = vmatpush.msra.mxu0 0.0
  %350 = vmatpush.msra.mxu0 0.0
  %351 = vmatpush.msra.mxu0 0.0
  %352 = vmatpush.msra.mxu0 0.0
  %353 = vmatpush.msra.mxu0 %v333
  %354 = vmatmul.f32.gmra.mxu0 %v336
  %v355 = vpop.f32.mrf.mxu0
  %v356 = vadd.f32 0.0, %v355
  %357 = vdwg.mxu0
  %358 = vrot.lane.b32.xlu0 %v221, 112
  %v359 = vpop.permute.xlu0 %358
  %360 = vrot.lane.b32.xlu0 %v221, 80
  %v361 = vpop.permute.xlu0 %360
  %v362 = vsel %vm229, %v359, 0
  %v364 = vsel %vm229, %v361, 0
  %366 = vmatpush.xpose.msra.mxu0 0.0
  %367 = vmatpush.xpose.msra.mxu0 0.0
  %368 = vmatpush.xpose.msra.mxu0 0.0
  %369 = vmatpush.xpose.msra.mxu0 0.0
  %370 = vmatpush.xpose.msra.mxu0 0.0
  %371 = vmatpush.xpose.msra.mxu0 0.0
  %372 = vmatpush.xpose.msra.mxu0 0.0
  %373 = vmatpush.xpose.msra.mxu0 0.0
  %374 = vmatpush.xpose.msra.mxu0 0.0
  %375 = vmatpush.xpose.msra.mxu0 0.0
  %376 = vmatpush.xpose.msra.mxu0 0.0
  %377 = vmatpush.xpose.msra.mxu0 0.0
  %378 = vmatpush.xpose.msra.mxu0 0.0
  %379 = vmatpush.xpose.msra.mxu0 0.0
  %380 = vmatpush.xpose.msra.mxu0 0.0
  %381 = vmatpush.xpose.msra.mxu0 %v364
  %382 = vmatmul.f32.gmra.mxu0 %v362
  %v383 = vpop.f32.mrf.mxu0
  %v384 = vadd.f32 0.0, %v383
  %385 = vdwg.mxu0
  %386 = vrot.lane.b32.xlu0 %v224, 112
  %v387 = vpop.permute.xlu0 %386
  %388 = vrot.lane.b32.xlu0 %v224, 80
  %v389 = vpop.permute.xlu0 %388
  %v390 = vsel %vm229, %v387, 0
  %v392 = vsel %vm229, %v389, 0
  %394 = vmatpush.xpose.msra.mxu0 0.0
  %395 = vmatpush.xpose.msra.mxu0 0.0
  %396 = vmatpush.xpose.msra.mxu0 0.0
  %397 = vmatpush.xpose.msra.mxu0 0.0
  %398 = vmatpush.xpose.msra.mxu0 0.0
  %399 = vmatpush.xpose.msra.mxu0 0.0
  %400 = vmatpush.xpose.msra.mxu0 0.0
  %401 = vmatpush.xpose.msra.mxu0 0.0
  %402 = vmatpush.xpose.msra.mxu0 0.0
  %403 = vmatpush.xpose.msra.mxu0 0.0
  %404 = vmatpush.xpose.msra.mxu0 0.0
  %405 = vmatpush.xpose.msra.mxu0 0.0
  %406 = vmatpush.xpose.msra.mxu0 0.0
  %407 = vmatpush.xpose.msra.mxu0 0.0
  %408 = vmatpush.xpose.msra.mxu0 0.0
  %409 = vmatpush.xpose.msra.mxu0 %v392
  %410 = vmatmul.f32.gmra.mxu0 %v390
  %v411 = vpop.f32.mrf.mxu0
  %v412 = vadd.f32 0.0, %v411
  %413 = vdwg.mxu0
  %v414 = vsel %vm120, %v384, -1e+30
  %v415 = vsel %vm120, %v412, -1e+30
  %v416 = vsel %vm283, %v414, -inf
  %417 = vmax.xlane.f32.xlu0 %v416
  %v418 = vpop.xlane.xlu0 %417
  %v419 = vsel %vm283, %v415, -inf
  %420 = vmax.xlane.f32.xlu0 %v419
  %v421 = vpop.xlane.xlu0 %420
  %v422 = vsub.f32 %v414, %v418
  %v423 = vsub.f32 %v415, %v421
  %v424 = vmul.f32 %v422, 1.442695
  %v425 = vpow.pop %v424
  %v426 = vmul.f32 %v423, 1.442695
  %v427 = vpow.pop %v426
  %v428 = vsel %vm283, %v425, 0.0
  %429 = vadd.xlane.f32.xlu0 %v428
  %v430 = vpop.xlane.xlu0 %429
  %v431 = vsel %vm283, %v427, 0.0
  %432 = vadd.xlane.f32.xlu0 %v431
  %v433 = vpop.xlane.xlu0 %432
  %v434 = vrcp.pop %v430
  %v435 = vrcp.pop %v433
  %v436 = vmul.f32 %v425, %v434
  %v437 = vmul.f32 %v427, %v435
  %438 = vrot.lane.b32.xlu0 %v221, 48
  %v439 = vpop.permute.xlu0 %438
  %v442 = vsel %vm283, %v436, 0
  %444 = vmatpush.msra.mxu0 0.0
  %445 = vmatpush.msra.mxu0 0.0
  %446 = vmatpush.msra.mxu0 0.0
  %447 = vmatpush.msra.mxu0 0.0
  %448 = vmatpush.msra.mxu0 0.0
  %449 = vmatpush.msra.mxu0 0.0
  %450 = vmatpush.msra.mxu0 0.0
  %451 = vmatpush.msra.mxu0 0.0
  %452 = vmatpush.msra.mxu0 0.0
  %453 = vmatpush.msra.mxu0 0.0
  %454 = vmatpush.msra.mxu0 0.0
  %455 = vmatpush.msra.mxu0 0.0
  %456 = vmatpush.msra.mxu0 0.0
  %457 = vmatpush.msra.mxu0 0.0
  %458 = vmatpush.msra.mxu0 0.0
  %459 = vmatpush.msra.mxu0 %v439
  %460 = vmatmul.f32.gmra.mxu0 %v442
  %v461 = vpop.f32.mrf.mxu0
  %v462 = vadd.f32 0.0, %v461
  %463 = vdwg.mxu0
  %464 = vrot.lane.b32.xlu0 %v224, 48
  %v465 = vpop.permute.xlu0 %464
  %v468 = vsel %vm283, %v437, 0
  %470 = vmatpush.msra.mxu0 0.0
  %471 = vmatpush.msra.mxu0 0.0
  %472 = vmatpush.msra.mxu0 0.0
  %473 = vmatpush.msra.mxu0 0.0
  %474 = vmatpush.msra.mxu0 0.0
  %475 = vmatpush.msra.mxu0 0.0
  %476 = vmatpush.msra.mxu0 0.0
  %477 = vmatpush.msra.mxu0 0.0
  %478 = vmatpush.msra.mxu0 0.0
  %479 = vmatpush.msra.mxu0 0.0
  %480 = vmatpush.msra.mxu0 0.0
  %481 = vmatpush.msra.mxu0 0.0
  %482 = vmatpush.msra.mxu0 0.0
  %483 = vmatpush.msra.mxu0 0.0
  %484 = vmatpush.msra.mxu0 0.0
  %485 = vmatpush.msra.mxu0 %v465
  %486 = vmatmul.f32.gmra.mxu0 %v468
  %v487 = vpop.f32.mrf.mxu0
  %v488 = vadd.f32 0.0, %v487
  %489 = vdwg.mxu0
  %492 = vrot.lane.b32.xlu0 %v462, 16
  %v493 = vpop.permute.xlu0 %492
  %494 = vrot.lane.b32.xlu0 %v488, 16
  %v495 = vpop.permute.xlu0 %494
  %v498 = vsel %vm229, %v330, %v493
  %v499 = vsel %vm229, %v356, %v495
  %v500 = vld [vmem:[%s7] sm:$0xff]
  %v501 = vld [vmem:[%s7 + $0x8] sm:$0xff]
  %v502 = vld [vmem:[%s7 + $0x10] sm:$0xff]
  %v503 = vld [vmem:[%s7 + $0x18] sm:$0xff]
  %v505 = vsel %vm123, %v498, 0
  %v508 = vsel %vm123, %v499, 0
  %510 = vmatpush.msra.mxu0 0.0
  %511 = vmatpush.msra.mxu0 0.0
  %512 = vmatpush.msra.mxu0 0.0
  %513 = vmatpush.msra.mxu0 0.0
  %514 = vmatpush.msra.mxu0 0.0
  %515 = vmatpush.msra.mxu0 0.0
  %516 = vmatpush.msra.mxu0 0.0
  %517 = vmatpush.msra.mxu0 0.0
  %518 = vmatpush.msra.mxu0 0.0
  %519 = vmatpush.msra.mxu0 0.0
  %520 = vmatpush.msra.mxu0 0.0
  %521 = vmatpush.msra.mxu0 0.0
  %522 = vmatpush.msra.mxu0 %v503
  %523 = vmatpush.msra.mxu0 %v502
  %524 = vmatpush.msra.mxu0 %v501
  %525 = vmatpush.msra.mxu0 %v500
  %526 = vmatmul.f32.gmra.mxu0 %v505
  %v527 = vpop.f32.mrf.mxu0
  %v528 = vadd.f32 0.0, %v527
  %529 = vmatmul.f32.gmra.mxu0 %v508
  %v530 = vpop.f32.mrf.mxu0
  %v531 = vadd.f32 0.0, %v530
  %532 = vdwg.mxu0
  %v533 = vadd.f32 %v113, %v528
  %v534 = vadd.f32 %v116, %v531
  %v535 = vld [vmem:[%s8] sm:$0x1]
  %v537 = vperm.slane %v535, 0
  %v539 = vadd.f32 %v533, %v537
  %v540 = vadd.f32 %v534, %v537
  %v541 = vld [vmem:[%s9] sm:$0x1]
  %v542 = vld [vmem:[%s10] sm:$0x1]
  %v543 = vsel %vm123, %v539, 0.0
  %544 = vadd.xlane.f32.xlu0 %v543
  %v545 = vpop.xlane.xlu0 %544
  %v546 = vsel %vm123, %v540, 0.0
  %547 = vadd.xlane.f32.xlu0 %v546
  %v548 = vpop.xlane.xlu0 %547
  %v549 = vmul.f32 %v545, %v136
  %v550 = vmul.f32 %v548, %v136
  %v551 = vmul.f32 %v539, %v539
  %v552 = vmul.f32 %v540, %v540
  %v553 = vsel %vm123, %v551, 0.0
  %554 = vadd.xlane.f32.xlu0 %v553
  %v555 = vpop.xlane.xlu0 %554
  %v556 = vsel %vm123, %v552, 0.0
  %557 = vadd.xlane.f32.xlu0 %v556
  %v558 = vpop.xlane.xlu0 %557
  %v559 = vmul.f32 %v555, %v136
  %v560 = vmul.f32 %v558, %v136
  %v561 = vmul.f32 %v549, %v549
  %v562 = vmul.f32 %v550, %v550
  %v563 = vsub.f32 %v559, %v561
  %v564 = vsub.f32 %v560, %v562
  %v565 = vsub.f32 %v539, %v549
  %v566 = vsub.f32 %v540, %v550
  %v567 = vadd.f32 %v563, 1e-05
  %v568 = vadd.f32 %v564, 1e-05
  %v569 = vrsqrt.pop %v567
  %v570 = vmul.f32 %v569, %v567
  %v571 = vmul.f32 %v570, %v569
  %v572 = vmul.f32 0.5, %v571
  %v573 = vsub.f32 1.5, %v572
  %v574 = vmul.f32 %v569, %v573
  %vm575 = vweird.f32 %v567
  %vm576 = vweird.f32 %v569
  %vm577 = vmor %vm575, %vm576
  %v578 = vsel %vm577, %v569, %v574
  %v579 = vrsqrt.pop %v568
  %v580 = vmul.f32 %v579, %v568
  %v581 = vmul.f32 %v580, %v579
  %v582 = vmul.f32 0.5, %v581
  %v583 = vsub.f32 1.5, %v582
  %v584 = vmul.f32 %v579, %v583
  %vm585 = vweird.f32 %v568
  %vm586 = vweird.f32 %v579
  %vm587 = vmor %vm585, %vm586
  %v588 = vsel %vm587, %v579, %v584
  %v589 = vmul.f32 %v565, %v578
  %v590 = vmul.f32 %v566, %v588
  %v592 = vperm.slane %v541, 0
  %v594 = vmul.f32 %v589, %v592
  %v595 = vmul.f32 %v590, %v592
  %v597 = vperm.slane %v542, 0
  %v599 = vadd.f32 %v594, %v597
  %v600 = vadd.f32 %v595, %v597
  %v601 = vld [vmem:[%s11] sm:$0xff]
  %v602 = vld [vmem:[%s11 + $0x8] sm:$0xff]
  %v603 = vld [vmem:[%s11 + $0x10] sm:$0xff]
  %v604 = vld [vmem:[%s11 + $0x18] sm:$0xff]
  %v605 = vld [vmem:[%s12] sm:$0x1]
  %v607 = vperm.slane %v605, 0
  %v610 = vsel %vm123, %v599, 0
  %v613 = vsel %vm123, %v600, 0
  %615 = vmatpush.msra.mxu0 0.0
  %616 = vmatpush.msra.mxu0 0.0
  %617 = vmatpush.msra.mxu0 0.0
  %618 = vmatpush.msra.mxu0 0.0
  %619 = vmatpush.msra.mxu0 0.0
  %620 = vmatpush.msra.mxu0 0.0
  %621 = vmatpush.msra.mxu0 0.0
  %622 = vmatpush.msra.mxu0 0.0
  %623 = vmatpush.msra.mxu0 0.0
  %624 = vmatpush.msra.mxu0 0.0
  %625 = vmatpush.msra.mxu0 0.0
  %626 = vmatpush.msra.mxu0 0.0
  %627 = vmatpush.msra.mxu0 %v604
  %628 = vmatpush.msra.mxu0 %v603
  %629 = vmatpush.msra.mxu0 %v602
  %630 = vmatpush.msra.mxu0 %v601
  %631 = vmatmul.f32.gmra.mxu0 %v610
  %v632 = vpop.f32.mrf.mxu0
  %v633 = vadd.f32 %v607, %v632
  %634 = vmatmul.f32.gmra.mxu0 %v613
  %v635 = vpop.f32.mrf.mxu0
  %v636 = vadd.f32 %v607, %v635
  %637 = vdwg.mxu0
  %v638 = vmul.f32 %v633, %v633
  %v639 = vmul.f32 %v636, %v636
  %v640 = vmul.f32 %v633, %v638
  %v641 = vmul.f32 %v636, %v639
  %v642 = vmul.f32 %v640, 0.044715
  %v643 = vmul.f32 %v641, 0.044715
  %v644 = vadd.f32 %v633, %v642
  %v645 = vadd.f32 %v636, %v643
  %v646 = vmul.f32 %v644, 0.7978846
  %v647 = vmul.f32 %v645, 0.7978846
  %v648 = vtanh.pop %v646
  %v649 = vtanh.pop %v647
  %v650 = vadd.f32 %v648, 1.0
  %v651 = vadd.f32 %v649, 1.0
  %v652 = vmul.f32 %v650, 0.5
  %v653 = vmul.f32 %v651, 0.5
  %v654 = vmul.f32 %v633, %v652
  %v655 = vmul.f32 %v636, %v653
  %v656 = vld [vmem:[%s13] sm:$0xff]
  %v657 = vld [vmem:[%s13 + $0x8] sm:$0xff]
  %v658 = vld [vmem:[%s13 + $0x10] sm:$0xff]
  %v659 = vld [vmem:[%s13 + $0x18] sm:$0xff]
  %v660 = vld [vmem:[%s13 + $0x20] sm:$0xff]
  %v661 = vld [vmem:[%s13 + $0x28] sm:$0xff]
  %v662 = vld [vmem:[%s13 + $0x30] sm:$0xff]
  %v663 = vld [vmem:[%s13 + $0x38] sm:$0xff]
  %v664 = vld [vmem:[%s13 + $0x40] sm:$0xff]
  %v665 = vld [vmem:[%s13 + $0x48] sm:$0xff]
  %v666 = vld [vmem:[%s13 + $0x50] sm:$0xff]
  %v667 = vld [vmem:[%s13 + $0x58] sm:$0xff]
  %v668 = vld [vmem:[%s13 + $0x60] sm:$0xff]
  %v669 = vld [vmem:[%s13 + $0x68] sm:$0xff]
  %v670 = vld [vmem:[%s13 + $0x70] sm:$0xff]
  %v671 = vld [vmem:[%s13 + $0x78] sm:$0xff]
  %v672 = vld [vmem:[%s14] sm:$0x1]
  %v674 = vperm.slane %v672, 0
  %676 = vmatpush.msra.mxu0 %v671
  %677 = vmatpush.msra.mxu0 %v670
  %678 = vmatpush.msra.mxu0 %v669
  %679 = vmatpush.msra.mxu0 %v668
  %680 = vmatpush.msra.mxu0 %v667
  %681 = vmatpush.msra.mxu0 %v666
  %682 = vmatpush.msra.mxu0 %v665
  %683 = vmatpush.msra.mxu0 %v664
  %684 = vmatpush.msra.mxu0 %v663
  %685 = vmatpush.msra.mxu0 %v662
  %686 = vmatpush.msra.mxu0 %v661
  %687 = vmatpush.msra.mxu0 %v660
  %688 = vmatpush.msra.mxu0 %v659
  %689 = vmatpush.msra.mxu0 %v658
  %690 = vmatpush.msra.mxu0 %v657
  %691 = vmatpush.msra.mxu0 %v656
  %692 = vmatmul.f32.gmra.mxu0 %v654
  %v693 = vpop.f32.mrf.mxu0
  %v694 = vadd.f32 %v674, %v693
  %695 = vmatmul.f32.gmra.mxu0 %v655
  %v696 = vpop.f32.mrf.mxu0
  %v697 = vadd.f32 %v674, %v696
  %698 = vdwg.mxu0
  %v699 = vadd.f32 %v539, %v694
  %v700 = vadd.f32 %v540, %v697
  %s701 = scalar_lea.vmem %s3, 1
  %v702 = vld [vmem:[%s701] sm:$0x1]
  %s703 = scalar_lea.vmem %s4, 1
  %v704 = vld [vmem:[%s703] sm:$0x1]
  %v705 = vsel %vm123, %v699, 0.0
  %706 = vadd.xlane.f32.xlu0 %v705
  %v707 = vpop.xlane.xlu0 %706
  %v708 = vsel %vm123, %v700, 0.0
  %709 = vadd.xlane.f32.xlu0 %v708
  %v710 = vpop.xlane.xlu0 %709
  %v711 = vmul.f32 %v707, %v136
  %v712 = vmul.f32 %v710, %v136
  %v713 = vmul.f32 %v699, %v699
  %v714 = vmul.f32 %v700, %v700
  %v715 = vsel %vm123, %v713, 0.0
  %716 = vadd.xlane.f32.xlu0 %v715
  %v717 = vpop.xlane.xlu0 %716
  %v718 = vsel %vm123, %v714, 0.0
  %719 = vadd.xlane.f32.xlu0 %v718
  %v720 = vpop.xlane.xlu0 %719
  %v721 = vmul.f32 %v717, %v136
  %v722 = vmul.f32 %v720, %v136
  %v723 = vmul.f32 %v711, %v711
  %v724 = vmul.f32 %v712, %v712
  %v725 = vsub.f32 %v721, %v723
  %v726 = vsub.f32 %v722, %v724
  %v727 = vsub.f32 %v699, %v711
  %v728 = vsub.f32 %v700, %v712
  %v729 = vadd.f32 %v725, 1e-05
  %v730 = vadd.f32 %v726, 1e-05
  %v731 = vrsqrt.pop %v729
  %v732 = vmul.f32 %v731, %v729
  %v733 = vmul.f32 %v732, %v731
  %v734 = vmul.f32 0.5, %v733
  %v735 = vsub.f32 1.5, %v734
  %v736 = vmul.f32 %v731, %v735
  %vm737 = vweird.f32 %v729
  %vm738 = vweird.f32 %v731
  %vm739 = vmor %vm737, %vm738
  %v740 = vsel %vm739, %v731, %v736
  %v741 = vrsqrt.pop %v730
  %v742 = vmul.f32 %v741, %v730
  %v743 = vmul.f32 %v742, %v741
  %v744 = vmul.f32 0.5, %v743
  %v745 = vsub.f32 1.5, %v744
  %v746 = vmul.f32 %v741, %v745
  %vm747 = vweird.f32 %v730
  %vm748 = vweird.f32 %v741
  %vm749 = vmor %vm747, %vm748
  %v750 = vsel %vm749, %v741, %v746
  %v751 = vmul.f32 %v727, %v740
  %v752 = vmul.f32 %v728, %v750
  %v754 = vperm.slane %v702, 0
  %v756 = vmul.f32 %v751, %v754
  %v757 = vmul.f32 %v752, %v754
  %v759 = vperm.slane %v704, 0
  %v761 = vadd.f32 %v756, %v759
  %v762 = vadd.f32 %v757, %v759
  %s763 = scalar_lea.vmem %s5, 32
  %v764 = vld [vmem:[%s763] sm:$0xff]
  %v765 = vld [vmem:[%s763 + $0x8] sm:$0xff]
  %v766 = vld [vmem:[%s763 + $0x10] sm:$0xff]
  %v767 = vld [vmem:[%s763 + $0x18] sm:$0xff]
  %s768 = scalar_lea.vmem %s6, 1
  %v769 = vld [vmem:[%s768] sm:$0x1]
  %v771 = vperm.slane %v769, 0
  %v774 = vsel %vm123, %v761, 0
  %v777 = vsel %vm123, %v762, 0
  %779 = vmatpush.msra.mxu0 0.0
  %780 = vmatpush.msra.mxu0 0.0
  %781 = vmatpush.msra.mxu0 0.0
  %782 = vmatpush.msra.mxu0 0.0
  %783 = vmatpush.msra.mxu0 0.0
  %784 = vmatpush.msra.mxu0 0.0
  %785 = vmatpush.msra.mxu0 0.0
  %786 = vmatpush.msra.mxu0 0.0
  %787 = vmatpush.msra.mxu0 0.0
  %788 = vmatpush.msra.mxu0 0.0
  %789 = vmatpush.msra.mxu0 0.0
  %790 = vmatpush.msra.mxu0 0.0
  %791 = vmatpush.msra.mxu0 %v767
  %792 = vmatpush.msra.mxu0 %v766
  %793 = vmatpush.msra.mxu0 %v765
  %794 = vmatpush.msra.mxu0 %v764
  %795 = vmatmul.f32.gmra.mxu0 %v774
  %v796 = vpop.f32.mrf.mxu0
  %v797 = vadd.f32 %v771, %v796
  %798 = vmatmul.f32.gmra.mxu0 %v777
  %v799 = vpop.f32.mrf.mxu0
  %v800 = vadd.f32 %v771, %v799
  %801 = vdwg.mxu0
  %803 = vrot.lane.b32.xlu0 %v797, 96
  %v804 = vpop.permute.xlu0 %803
  %v805 = vsel %vm229, %v797, 0
  %v807 = vsel %vm229, %v804, 0
  %809 = vmatpush.xpose.msra.mxu0 0.0
  %810 = vmatpush.xpose.msra.mxu0 0.0
  %811 = vmatpush.xpose.msra.mxu0 0.0
  %812 = vmatpush.xpose.msra.mxu0 0.0
  %813 = vmatpush.xpose.msra.mxu0 0.0
  %814 = vmatpush.xpose.msra.mxu0 0.0
  %815 = vmatpush.xpose.msra.mxu0 0.0
  %816 = vmatpush.xpose.msra.mxu0 0.0
  %817 = vmatpush.xpose.msra.mxu0 0.0
  %818 = vmatpush.xpose.msra.mxu0 0.0
  %819 = vmatpush.xpose.msra.mxu0 0.0
  %820 = vmatpush.xpose.msra.mxu0 0.0
  %821 = vmatpush.xpose.msra.mxu0 0.0
  %822 = vmatpush.xpose.msra.mxu0 0.0
  %823 = vmatpush.xpose.msra.mxu0 0.0
  %824 = vmatpush.xpose.msra.mxu0 %v807
  %825 = vmatmul.f32.gmra.mxu0 %v805
  %v826 = vpop.f32.mrf.mxu0
  %v827 = vadd.f32 0.0, %v826
  %828 = vdwg.mxu0
  %830 = vrot.lane.b32.xlu0 %v800, 96
  %v831 = vpop.permute.xlu0 %830
  %v832 = vsel %vm229, %v800, 0
  %v834 = vsel %vm229, %v831, 0
  %836 = vmatpush.xpose.msra.mxu0 0.0
  %837 = vmatpush.xpose.msra.mxu0 0.0
  %838 = vmatpush.xpose.msra.mxu0 0.0
  %839 = vmatpush.xpose.msra.mxu0 0.0
  %840 = vmatpush.xpose.msra.mxu0 0.0
  %841 = vmatpush.xpose.msra.mxu0 0.0
  %842 = vmatpush.xpose.msra.mxu0 0.0
  %843 = vmatpush.xpose.msra.mxu0 0.0
  %844 = vmatpush.xpose.msra.mxu0 0.0
  %845 = vmatpush.xpose.msra.mxu0 0.0
  %846 = vmatpush.xpose.msra.mxu0 0.0
  %847 = vmatpush.xpose.msra.mxu0 0.0
  %848 = vmatpush.xpose.msra.mxu0 0.0
  %849 = vmatpush.xpose.msra.mxu0 0.0
  %850 = vmatpush.xpose.msra.mxu0 0.0
  %851 = vmatpush.xpose.msra.mxu0 %v834
  %852 = vmatmul.f32.gmra.mxu0 %v832
  %v853 = vpop.f32.mrf.mxu0
  %v854 = vadd.f32 0.0, %v853
  %855 = vdwg.mxu0
  %v856 = vsel %vm120, %v827, -1e+30
  %v857 = vsel %vm120, %v854, -1e+30
  %v858 = vsel %vm283, %v856, -inf
  %859 = vmax.xlane.f32.xlu0 %v858
  %v860 = vpop.xlane.xlu0 %859
  %v861 = vsel %vm283, %v857, -inf
  %862 = vmax.xlane.f32.xlu0 %v861
  %v863 = vpop.xlane.xlu0 %862
  %v864 = vsub.f32 %v856, %v860
  %v865 = vsub.f32 %v857, %v863
  %v866 = vmul.f32 %v864, 1.442695
  %v867 = vpow.pop %v866
  %v868 = vmul.f32 %v865, 1.442695
  %v869 = vpow.pop %v868
  %v870 = vsel %vm283, %v867, 0.0
  %871 = vadd.xlane.f32.xlu0 %v870
  %v872 = vpop.xlane.xlu0 %871
  %v873 = vsel %vm283, %v869, 0.0
  %874 = vadd.xlane.f32.xlu0 %v873
  %v875 = vpop.xlane.xlu0 %874
  %v876 = vrcp.pop %v872
  %v877 = vrcp.pop %v875
  %v878 = vmul.f32 %v867, %v876
  %v879 = vmul.f32 %v869, %v877
  %880 = vrot.lane.b32.xlu0 %v797, 64
  %v881 = vpop.permute.xlu0 %880
  %v884 = vsel %vm283, %v878, 0
  %886 = vmatpush.msra.mxu0 0.0
  %887 = vmatpush.msra.mxu0 0.0
  %888 = vmatpush.msra.mxu0 0.0
  %889 = vmatpush.msra.mxu0 0.0
  %890 = vmatpush.msra.mxu0 0.0
  %891 = vmatpush.msra.mxu0 0.0
  %892 = vmatpush.msra.mxu0 0.0
  %893 = vmatpush.msra.mxu0 0.0
  %894 = vmatpush.msra.mxu0 0.0
  %895 = vmatpush.msra.mxu0 0.0
  %896 = vmatpush.msra.mxu0 0.0
  %897 = vmatpush.msra.mxu0 0.0
  %898 = vmatpush.msra.mxu0 0.0
  %899 = vmatpush.msra.mxu0 0.0
  %900 = vmatpush.msra.mxu0 0.0
  %901 = vmatpush.msra.mxu0 %v881
  %902 = vmatmul.f32.gmra.mxu0 %v884
  %v903 = vpop.f32.mrf.mxu0
  %v904 = vadd.f32 0.0, %v903
  %905 = vdwg.mxu0
  %906 = vrot.lane.b32.xlu0 %v800, 64
  %v907 = vpop.permute.xlu0 %906
  %v910 = vsel %vm283, %v879, 0
  %912 = vmatpush.msra.mxu0 0.0
  %913 = vmatpush.msra.mxu0 0.0
  %914 = vmatpush.msra.mxu0 0.0
  %915 = vmatpush.msra.mxu0 0.0
  %916 = vmatpush.msra.mxu0 0.0
  %917 = vmatpush.msra.mxu0 0.0
  %918 = vmatpush.msra.mxu0 0.0
  %919 = vmatpush.msra.mxu0 0.0
  %920 = vmatpush.msra.mxu0 0.0
  %921 = vmatpush.msra.mxu0 0.0
  %922 = vmatpush.msra.mxu0 0.0
  %923 = vmatpush.msra.mxu0 0.0
  %924 = vmatpush.msra.mxu0 0.0
  %925 = vmatpush.msra.mxu0 0.0
  %926 = vmatpush.msra.mxu0 0.0
  %927 = vmatpush.msra.mxu0 %v907
  %928 = vmatmul.f32.gmra.mxu0 %v910
  %v929 = vpop.f32.mrf.mxu0
  %v930 = vadd.f32 0.0, %v929
  %931 = vdwg.mxu0
  %932 = vrot.lane.b32.xlu0 %v797, 112
  %v933 = vpop.permute.xlu0 %932
  %934 = vrot.lane.b32.xlu0 %v797, 80
  %v935 = vpop.permute.xlu0 %934
  %v936 = vsel %vm229, %v933, 0
  %v938 = vsel %vm229, %v935, 0
  %940 = vmatpush.xpose.msra.mxu0 0.0
  %941 = vmatpush.xpose.msra.mxu0 0.0
  %942 = vmatpush.xpose.msra.mxu0 0.0
  %943 = vmatpush.xpose.msra.mxu0 0.0
  %944 = vmatpush.xpose.msra.mxu0 0.0
  %945 = vmatpush.xpose.msra.mxu0 0.0
  %946 = vmatpush.xpose.msra.mxu0 0.0
  %947 = vmatpush.xpose.msra.mxu0 0.0
  %948 = vmatpush.xpose.msra.mxu0 0.0
  %949 = vmatpush.xpose.msra.mxu0 0.0
  %950 = vmatpush.xpose.msra.mxu0 0.0
  %951 = vmatpush.xpose.msra.mxu0 0.0
  %952 = vmatpush.xpose.msra.mxu0 0.0
  %953 = vmatpush.xpose.msra.mxu0 0.0
  %954 = vmatpush.xpose.msra.mxu0 0.0
  %955 = vmatpush.xpose.msra.mxu0 %v938
  %956 = vmatmul.f32.gmra.mxu0 %v936
  %v957 = vpop.f32.mrf.mxu0
  %v958 = vadd.f32 0.0, %v957
  %959 = vdwg.mxu0
  %960 = vrot.lane.b32.xlu0 %v800, 112
  %v961 = vpop.permute.xlu0 %960
  %962 = vrot.lane.b32.xlu0 %v800, 80
  %v963 = vpop.permute.xlu0 %962
  %v964 = vsel %vm229, %v961, 0
  %v966 = vsel %vm229, %v963, 0
  %968 = vmatpush.xpose.msra.mxu0 0.0
  %969 = vmatpush.xpose.msra.mxu0 0.0
  %970 = vmatpush.xpose.msra.mxu0 0.0
  %971 = vmatpush.xpose.msra.mxu0 0.0
  %972 = vmatpush.xpose.msra.mxu0 0.0
  %973 = vmatpush.xpose.msra.mxu0 0.0
  %974 = vmatpush.xpose.msra.mxu0 0.0
  %975 = vmatpush.xpose.msra.mxu0 0.0
  %976 = vmatpush.xpose.msra.mxu0 0.0
  %977 = vmatpush.xpose.msra.mxu0 0.0
  %978 = vmatpush.xpose.msra.mxu0 0.0
  %979 = vmatpush.xpose.msra.mxu0 0.0
  %980 = vmatpush.xpose.msra.mxu0 0.0
  %981 = vmatpush.xpose.msra.mxu0 0.0
  %982 = vmatpush.xpose.msra.mxu0 0.0
  %983 = vmatpush.xpose.msra.mxu0 %v966
  %984 = vmatmul.f32.gmra.mxu0 %v964
  %v985 = vpop.f32.mrf.mxu0
  %v986 = vadd.f32 0.0, %v985
  %987 = vdwg.mxu0
  %v988 = vsel %vm120, %v958, -1e+30
  %v989 = vsel %vm120, %v986, -1e+30
  %v990 = vsel %vm283, %v988, -inf
  %991 = vmax.xlane.f32.xlu0 %v990
  %v992 = vpop.xlane.xlu0 %991
  %v993 = vsel %vm283, %v989, -inf
  %994 = vmax.xlane.f32.xlu0 %v993
  %v995 = vpop.xlane.xlu0 %994
  %v996 = vsub.f32 %v988, %v992
  %v997 = vsub.f32 %v989, %v995
  %v998 = vmul.f32 %v996, 1.442695
  %v999 = vpow.pop %v998
  %v1000 = vmul.f32 %v997, 1.442695
  %v1001 = vpow.pop %v1000
  %v1002 = vsel %vm283, %v999, 0.0
  %1003 = vadd.xlane.f32.xlu0 %v1002
  %v1004 = vpop.xlane.xlu0 %1003
  %v1005 = vsel %vm283, %v1001, 0.0
  %1006 = vadd.xlane.f32.xlu0 %v1005
  %v1007 = vpop.xlane.xlu0 %1006
  %v1008 = vrcp.pop %v1004
  %v1009 = vrcp.pop %v1007
  %v1010 = vmul.f32 %v999, %v1008
  %v1011 = vmul.f32 %v1001, %v1009
  %1012 = vrot.lane.b32.xlu0 %v797, 48
  %v1013 = vpop.permute.xlu0 %1012
  %v1016 = vsel %vm283, %v1010, 0
  %1018 = vmatpush.msra.mxu0 0.0
  %1019 = vmatpush.msra.mxu0 0.0
  %1020 = vmatpush.msra.mxu0 0.0
  %1021 = vmatpush.msra.mxu0 0.0
  %1022 = vmatpush.msra.mxu0 0.0
  %1023 = vmatpush.msra.mxu0 0.0
  %1024 = vmatpush.msra.mxu0 0.0
  %1025 = vmatpush.msra.mxu0 0.0
  %1026 = vmatpush.msra.mxu0 0.0
  %1027 = vmatpush.msra.mxu0 0.0
  %1028 = vmatpush.msra.mxu0 0.0
  %1029 = vmatpush.msra.mxu0 0.0
  %1030 = vmatpush.msra.mxu0 0.0
  %1031 = vmatpush.msra.mxu0 0.0
  %1032 = vmatpush.msra.mxu0 0.0
  %1033 = vmatpush.msra.mxu0 %v1013
  %1034 = vmatmul.f32.gmra.mxu0 %v1016
  %v1035 = vpop.f32.mrf.mxu0
  %v1036 = vadd.f32 0.0, %v1035
  %1037 = vdwg.mxu0
  %1038 = vrot.lane.b32.xlu0 %v800, 48
  %v1039 = vpop.permute.xlu0 %1038
  %v1042 = vsel %vm283, %v1011, 0
  %1044 = vmatpush.msra.mxu0 0.0
  %1045 = vmatpush.msra.mxu0 0.0
  %1046 = vmatpush.msra.mxu0 0.0
  %1047 = vmatpush.msra.mxu0 0.0
  %1048 = vmatpush.msra.mxu0 0.0
  %1049 = vmatpush.msra.mxu0 0.0
  %1050 = vmatpush.msra.mxu0 0.0
  %1051 = vmatpush.msra.mxu0 0.0
  %1052 = vmatpush.msra.mxu0 0.0
  %1053 = vmatpush.msra.mxu0 0.0
  %1054 = vmatpush.msra.mxu0 0.0
  %1055 = vmatpush.msra.mxu0 0.0
  %1056 = vmatpush.msra.mxu0 0.0
  %1057 = vmatpush.msra.mxu0 0.0
  %1058 = vmatpush.msra.mxu0 0.0
  %1059 = vmatpush.msra.mxu0 %v1039
  %1060 = vmatmul.f32.gmra.mxu0 %v1042
  %v1061 = vpop.f32.mrf.mxu0
  %v1062 = vadd.f32 0.0, %v1061
  %1063 = vdwg.mxu0
  %1066 = vrot.lane.b32.xlu0 %v1036, 16
  %v1067 = vpop.permute.xlu0 %1066
  %1068 = vrot.lane.b32.xlu0 %v1062, 16
  %v1069 = vpop.permute.xlu0 %1068
  %v1072 = vsel %vm229, %v904, %v1067
  %v1073 = vsel %vm229, %v930, %v1069
  %s1074 = scalar_lea.vmem %s7, 32
  %v1075 = vld [vmem:[%s1074] sm:$0xff]
  %v1076 = vld [vmem:[%s1074 + $0x8] sm:$0xff]
  %v1077 = vld [vmem:[%s1074 + $0x10] sm:$0xff]
  %v1078 = vld [vmem:[%s1074 + $0x18] sm:$0xff]
  %v1080 = vsel %vm123, %v1072, 0
  %v1083 = vsel %vm123, %v1073, 0
  %1085 = vmatpush.msra.mxu0 0.0
  %1086 = vmatpush.msra.mxu0 0.0
  %1087 = vmatpush.msra.mxu0 0.0
  %1088 = vmatpush.msra.mxu0 0.0
  %1089 = vmatpush.msra.mxu0 0.0
  %1090 = vmatpush.msra.mxu0 0.0
  %1091 = vmatpush.msra.mxu0 0.0
  %1092 = vmatpush.msra.mxu0 0.0
  %1093 = vmatpush.msra.mxu0 0.0
  %1094 = vmatpush.msra.mxu0 0.0
  %1095 = vmatpush.msra.mxu0 0.0
  %1096 = vmatpush.msra.mxu0 0.0
  %1097 = vmatpush.msra.mxu0 %v1078
  %1098 = vmatpush.msra.mxu0 %v1077
  %1099 = vmatpush.msra.mxu0 %v1076
  %1100 = vmatpush.msra.mxu0 %v1075
  %1101 = vmatmul.f32.gmra.mxu0 %v1080
  %v1102 = vpop.f32.mrf.mxu0
  %v1103 = vadd.f32 0.0, %v1102
  %1104 = vmatmul.f32.gmra.mxu0 %v1083
  %v1105 = vpop.f32.mrf.mxu0
  %v1106 = vadd.f32 0.0, %v1105
  %1107 = vdwg.mxu0
  %v1108 = vadd.f32 %v699, %v1103
  %v1109 = vadd.f32 %v700, %v1106
  %s1110 = scalar_lea.vmem %s8, 1
  %v1111 = vld [vmem:[%s1110] sm:$0x1]
  %v1113 = vperm.slane %v1111, 0
  %v1115 = vadd.f32 %v1108, %v1113
  %v1116 = vadd.f32 %v1109, %v1113
  %s1117 = scalar_lea.vmem %s9, 1
  %v1118 = vld [vmem:[%s1117] sm:$0x1]
  %s1119 = scalar_lea.vmem %s10, 1
  %v1120 = vld [vmem:[%s1119] sm:$0x1]
  %v1121 = vsel %vm123, %v1115, 0.0
  %1122 = vadd.xlane.f32.xlu0 %v1121
  %v1123 = vpop.xlane.xlu0 %1122
  %v1124 = vsel %vm123, %v1116, 0.0
  %1125 = vadd.xlane.f32.xlu0 %v1124
  %v1126 = vpop.xlane.xlu0 %1125
  %v1127 = vmul.f32 %v1123, %v136
  %v1128 = vmul.f32 %v1126, %v136
  %v1129 = vmul.f32 %v1115, %v1115
  %v1130 = vmul.f32 %v1116, %v1116
  %v1131 = vsel %vm123, %v1129, 0.0
  %1132 = vadd.xlane.f32.xlu0 %v1131
  %v1133 = vpop.xlane.xlu0 %1132
  %v1134 = vsel %vm123, %v1130, 0.0
  %1135 = vadd.xlane.f32.xlu0 %v1134
  %v1136 = vpop.xlane.xlu0 %1135
  %v1137 = vmul.f32 %v1133, %v136
  %v1138 = vmul.f32 %v1136, %v136
  %v1139 = vmul.f32 %v1127, %v1127
  %v1140 = vmul.f32 %v1128, %v1128
  %v1141 = vsub.f32 %v1137, %v1139
  %v1142 = vsub.f32 %v1138, %v1140
  %v1143 = vsub.f32 %v1115, %v1127
  %v1144 = vsub.f32 %v1116, %v1128
  %v1145 = vadd.f32 %v1141, 1e-05
  %v1146 = vadd.f32 %v1142, 1e-05
  %v1147 = vrsqrt.pop %v1145
  %v1148 = vmul.f32 %v1147, %v1145
  %v1149 = vmul.f32 %v1148, %v1147
  %v1150 = vmul.f32 0.5, %v1149
  %v1151 = vsub.f32 1.5, %v1150
  %v1152 = vmul.f32 %v1147, %v1151
  %vm1153 = vweird.f32 %v1145
  %vm1154 = vweird.f32 %v1147
  %vm1155 = vmor %vm1153, %vm1154
  %v1156 = vsel %vm1155, %v1147, %v1152
  %v1157 = vrsqrt.pop %v1146
  %v1158 = vmul.f32 %v1157, %v1146
  %v1159 = vmul.f32 %v1158, %v1157
  %v1160 = vmul.f32 0.5, %v1159
  %v1161 = vsub.f32 1.5, %v1160
  %v1162 = vmul.f32 %v1157, %v1161
  %vm1163 = vweird.f32 %v1146
  %vm1164 = vweird.f32 %v1157
  %vm1165 = vmor %vm1163, %vm1164
  %v1166 = vsel %vm1165, %v1157, %v1162
  %v1167 = vmul.f32 %v1143, %v1156
  %v1168 = vmul.f32 %v1144, %v1166
  %v1170 = vperm.slane %v1118, 0
  %v1172 = vmul.f32 %v1167, %v1170
  %v1173 = vmul.f32 %v1168, %v1170
  %v1175 = vperm.slane %v1120, 0
  %v1177 = vadd.f32 %v1172, %v1175
  %v1178 = vadd.f32 %v1173, %v1175
  %s1179 = scalar_lea.vmem %s11, 32
  %v1180 = vld [vmem:[%s1179] sm:$0xff]
  %v1181 = vld [vmem:[%s1179 + $0x8] sm:$0xff]
  %v1182 = vld [vmem:[%s1179 + $0x10] sm:$0xff]
  %v1183 = vld [vmem:[%s1179 + $0x18] sm:$0xff]
  %s1184 = scalar_lea.vmem %s12, 1
  %v1185 = vld [vmem:[%s1184] sm:$0x1]
  %v1187 = vperm.slane %v1185, 0
  %v1190 = vsel %vm123, %v1177, 0
  %v1193 = vsel %vm123, %v1178, 0
  %1195 = vmatpush.msra.mxu0 0.0
  %1196 = vmatpush.msra.mxu0 0.0
  %1197 = vmatpush.msra.mxu0 0.0
  %1198 = vmatpush.msra.mxu0 0.0
  %1199 = vmatpush.msra.mxu0 0.0
  %1200 = vmatpush.msra.mxu0 0.0
  %1201 = vmatpush.msra.mxu0 0.0
  %1202 = vmatpush.msra.mxu0 0.0
  %1203 = vmatpush.msra.mxu0 0.0
  %1204 = vmatpush.msra.mxu0 0.0
  %1205 = vmatpush.msra.mxu0 0.0
  %1206 = vmatpush.msra.mxu0 0.0
  %1207 = vmatpush.msra.mxu0 %v1183
  %1208 = vmatpush.msra.mxu0 %v1182
  %1209 = vmatpush.msra.mxu0 %v1181
  %1210 = vmatpush.msra.mxu0 %v1180
  %1211 = vmatmul.f32.gmra.mxu0 %v1190
  %v1212 = vpop.f32.mrf.mxu0
  %v1213 = vadd.f32 %v1187, %v1212
  %1214 = vmatmul.f32.gmra.mxu0 %v1193
  %v1215 = vpop.f32.mrf.mxu0
  %v1216 = vadd.f32 %v1187, %v1215
  %1217 = vdwg.mxu0
  %v1218 = vmul.f32 %v1213, %v1213
  %v1219 = vmul.f32 %v1216, %v1216
  %v1220 = vmul.f32 %v1213, %v1218
  %v1221 = vmul.f32 %v1216, %v1219
  %v1222 = vmul.f32 %v1220, 0.044715
  %v1223 = vmul.f32 %v1221, 0.044715
  %v1224 = vadd.f32 %v1213, %v1222
  %v1225 = vadd.f32 %v1216, %v1223
  %v1226 = vmul.f32 %v1224, 0.7978846
  %v1227 = vmul.f32 %v1225, 0.7978846
  %v1228 = vtanh.pop %v1226
  %v1229 = vtanh.pop %v1227
  %v1230 = vadd.f32 %v1228, 1.0
  %v1231 = vadd.f32 %v1229, 1.0
  %v1232 = vmul.f32 %v1230, 0.5
  %v1233 = vmul.f32 %v1231, 0.5
  %v1234 = vmul.f32 %v1213, %v1232
  %v1235 = vmul.f32 %v1216, %v1233
  %s1236 = scalar_lea.vmem %s13, 128
  %v1237 = vld [vmem:[%s1236] sm:$0xff]
  %v1238 = vld [vmem:[%s1236 + $0x8] sm:$0xff]
  %v1239 = vld [vmem:[%s1236 + $0x10] sm:$0xff]
  %v1240 = vld [vmem:[%s1236 + $0x18] sm:$0xff]
  %v1241 = vld [vmem:[%s1236 + $0x20] sm:$0xff]
  %v1242 = vld [vmem:[%s1236 + $0x28] sm:$0xff]
  %v1243 = vld [vmem:[%s1236 + $0x30] sm:$0xff]
  %v1244 = vld [vmem:[%s1236 + $0x38] sm:$0xff]
  %v1245 = vld [vmem:[%s1236 + $0x40] sm:$0xff]
  %v1246 = vld [vmem:[%s1236 + $0x48] sm:$0xff]
  %v1247 = vld [vmem:[%s1236 + $0x50] sm:$0xff]
  %v1248 = vld [vmem:[%s1236 + $0x58] sm:$0xff]
  %v1249 = vld [vmem:[%s1236 + $0x60] sm:$0xff]
  %v1250 = vld [vmem:[%s1236 + $0x68] sm:$0xff]
  %v1251 = vld [vmem:[%s1236 + $0x70] sm:$0xff]
  %v1252 = vld [vmem:[%s1236 + $0x78] sm:$0xff]
  %s1253 = scalar_lea.vmem %s14, 1
  %v1254 = vld [vmem:[%s1253] sm:$0x1]
  %v1256 = vperm.slane %v1254, 0
  %1258 = vmatpush.msra.mxu0 %v1252
  %1259 = vmatpush.msra.mxu0 %v1251
  %1260 = vmatpush.msra.mxu0 %v1250
  %1261 = vmatpush.msra.mxu0 %v1249
  %1262 = vmatpush.msra.mxu0 %v1248
  %1263 = vmatpush.msra.mxu0 %v1247
  %1264 = vmatpush.msra.mxu0 %v1246
  %1265 = vmatpush.msra.mxu0 %v1245
  %1266 = vmatpush.msra.mxu0 %v1244
  %1267 = vmatpush.msra.mxu0 %v1243
  %1268 = vmatpush.msra.mxu0 %v1242
  %1269 = vmatpush.msra.mxu0 %v1241
  %1270 = vmatpush.msra.mxu0 %v1240
  %1271 = vmatpush.msra.mxu0 %v1239
  %1272 = vmatpush.msra.mxu0 %v1238
  %1273 = vmatpush.msra.mxu0 %v1237
  %1274 = vmatmul.f32.gmra.mxu0 %v1234
  %v1275 = vpop.f32.mrf.mxu0
  %v1276 = vadd.f32 %v1256, %v1275
  %1277 = vmatmul.f32.gmra.mxu0 %v1235
  %v1278 = vpop.f32.mrf.mxu0
  %v1279 = vadd.f32 %v1256, %v1278
  %1280 = vdwg.mxu0
  %v1281 = vadd.f32 %v1115, %v1276
  %v1282 = vadd.f32 %v1116, %v1279
  %v1283 = vld [vmem:[%s15] sm:$0x1]
  %v1284 = vld [vmem:[%s16] sm:$0x1]
  %v1287 = vrot.slane %v1282, 7
  %vm1290 = vcmask 261127
  %v1291 = vsel %vm1290, %v1281, 0.0
  %1292 = vadd.xlane.f32.xlu0 %v1291
  %v1293 = vpop.xlane.xlu0 %1292
  %vm1294 = vcmask 253952
  %v1295 = vsel %vm1294, %v1287, 0.0
  %1296 = vadd.xlane.f32.xlu0 %v1295
  %v1297 = vpop.xlane.xlu0 %1296
  %v1298 = vmul.f32 %v1293, %v136
  %v1299 = vmul.f32 %v1297, %v136
  %v1300 = vmul.f32 %v1281, %v1281
  %v1301 = vmul.f32 %v1282, %v1282
  %v1304 = vrot.slane %v1301, 7
  %v1307 = vsel %vm1290, %v1300, 0.0
  %1308 = vadd.xlane.f32.xlu0 %v1307
  %v1309 = vpop.xlane.xlu0 %1308
  %v1310 = vsel %vm1294, %v1304, 0.0
  %1311 = vadd.xlane.f32.xlu0 %v1310
  %v1312 = vpop.xlane.xlu0 %1311
  %v1313 = vmul.f32 %v1309, %v136
  %v1314 = vmul.f32 %v1312, %v136
  %v1315 = vmul.f32 %v1298, %v1298
  %v1316 = vmul.f32 %v1299, %v1299
  %v1317 = vsub.f32 %v1313, %v1315
  %v1318 = vsub.f32 %v1314, %v1316
  %v1321 = vrot.slane %v1299, 1
  %v1324 = vsub.f32 %v1281, %v1298
  %v1325 = vsub.f32 %v1282, %v1321
  %v1326 = vadd.f32 %v1317, 1e-05
  %v1327 = vadd.f32 %v1318, 1e-05
  %v1328 = vrsqrt.pop %v1326
  %v1329 = vmul.f32 %v1328, %v1326
  %v1330 = vmul.f32 %v1329, %v1328
  %v1331 = vmul.f32 0.5, %v1330
  %v1332 = vsub.f32 1.5, %v1331
  %v1333 = vmul.f32 %v1328, %v1332
  %vm1334 = vweird.f32 %v1326
  %vm1335 = vweird.f32 %v1328
  %vm1336 = vmor %vm1334, %vm1335
  %v1337 = vsel %vm1336, %v1328, %v1333
  %v1338 = vrsqrt.pop %v1327
  %v1339 = vmul.f32 %v1338, %v1327
  %v1340 = vmul.f32 %v1339, %v1338
  %v1341 = vmul.f32 0.5, %v1340
  %v1342 = vsub.f32 1.5, %v1341
  %v1343 = vmul.f32 %v1338, %v1342
  %vm1344 = vweird.f32 %v1327
  %vm1345 = vweird.f32 %v1338
  %vm1346 = vmor %vm1344, %vm1345
  %v1347 = vsel %vm1346, %v1338, %v1343
  %v1350 = vrot.slane %v1347, 1
  %v1353 = vmul.f32 %v1324, %v1337
  %v1354 = vmul.f32 %v1325, %v1350
  %v1356 = vperm.slane %v1283, 0
  %v1358 = vmul.f32 %v1353, %v1356
  %v1359 = vmul.f32 %v1354, %v1356
  %v1361 = vperm.slane %v1284, 0
  %v1363 = vadd.f32 %v1358, %v1361
  %v1364 = vadd.f32 %v1359, %v1361
  %v1365 = vld [vmem:[%s17] sm:$0xff]
  %v1366 = vld [vmem:[%s17 + $0x8] sm:$0xff]
  %v1367 = vld [vmem:[%s17 + $0x10] sm:$0xff]
  %v1368 = vld [vmem:[%s17 + $0x18] sm:$0xff]
  %v1369 = vld [vmem:[%s18] sm:$0x1]
  %v1371 = vperm.slane %v1369, 0
  %v1375 = vrot.slane %v1363, 7
  %v1376 = vrot.slane %v1364, 6
  %vm1377 = vcmask 1041409
  %v1378 = vsel %vm1377, %v1376, %v1375
  %v1379 = vsel %vm123, %v1378, 0
  %1381 = vmatpush.msra.mxu0 0.0
  %1382 = vmatpush.msra.mxu0 0.0
  %1383 = vmatpush.msra.mxu0 0.0
  %1384 = vmatpush.msra.mxu0 0.0
  %1385 = vmatpush.msra.mxu0 0.0
  %1386 = vmatpush.msra.mxu0 0.0
  %1387 = vmatpush.msra.mxu0 0.0
  %1388 = vmatpush.msra.mxu0 0.0
  %1389 = vmatpush.msra.mxu0 0.0
  %1390 = vmatpush.msra.mxu0 0.0
  %1391 = vmatpush.msra.mxu0 0.0
  %1392 = vmatpush.msra.mxu0 0.0
  %1393 = vmatpush.msra.mxu0 %v1368
  %1394 = vmatpush.msra.mxu0 %v1367
  %1395 = vmatpush.msra.mxu0 %v1366
  %1396 = vmatpush.msra.mxu0 %v1365
  %1397 = vmatmul.f32.gmra.mxu0 %v1379
  %v1398 = vpop.f32.mrf.mxu0
  %v1399 = vadd.f32 %v1371, %v1398
  %1400 = vdwg.mxu0
  %1401 = vst [vmem:[%s19] sm:$0x3] %v1399
  // Predicated region
  $region78: #{gpt_forward.1} parent=0 // pred_check
    _
  $region79: #{gpt_forward.1} parent=0 // pred_check_branch
    %1403 = sbr.rel (0) target = $region81
  $region80: #{gpt_forward.1} parent=0 // pred_region
    _
  $region81: #{gpt_forward.1} parent=0 // pred_fallthru
    _
  // Predicated region
  $region82: #{gpt_forward.1} parent=0 // pred_check
    _
  $region83: #{gpt_forward.1} parent=0 // pred_check_branch
    %1405 = sbr.rel (0) target = $region85
  $region84: #{gpt_forward.1} parent=0 // pred_region
    _
  $region85: #{gpt_forward.1} parent=0 // pred_fallthru
    _

</llo_original>
